<compile_context>
chip_gen: v5e
topology: v5e:2x2
jax: 0.10.0
libtpu: 0.0.40
codegen_flags: <defaults>
</compile_context>

<pallas_src>
import math

import jax
import jax.numpy as jnp
from jax.experimental import pallas as pl
from jax.experimental.pallas import tpu as pltpu


# ----------------------------------------------------------------------------
# Kernels
# ----------------------------------------------------------------------------
def encode_transform_kernel(x_ref, w_enc_ref, b_enc_ref, w1_ref, o_ref):
    """t1 = (x @ W_enc + b_enc) @ W1 for one tile of node rows."""
    h0 = jnp.dot(x_ref[...], w_enc_ref[...],
                 preferred_element_type=jnp.float32) + b_enc_ref[...]
    t1 = jnp.dot(h0.astype(w1_ref.dtype), w1_ref[...],
                 preferred_element_type=jnp.float32)
    o_ref[...] = t1.astype(o_ref.dtype)


def gcn_layer1_kernel(counts_ref, cols_ref, ahat_ref, t_ref, b_ref,
                      w_next_ref, o_ref, acc_ref):
    """out = relu(Ahat @ t1 + b1) @ W2 with a compacted-block-list reduction.

    Grid = (row tiles, reduction steps). Step (i, k) processes the k-th
    *nonzero* Ahat block of row tile i (column from the scalar-prefetched block
    list). Steps past counts[i] alias the previous block, so their DMA is
    elided, and the MXU work is skipped via pl.when.
    """
    i = pl.program_id(0)
    k = pl.program_id(1)
    n_k = pl.num_programs(1)
    tk = ahat_ref.shape[1]

    @pl.when(k == 0)
    def _():
        # Fold the bias into the accumulator init instead of a post-dot add.
        acc_ref[...] = jnp.broadcast_to(b_ref[...], acc_ref.shape)

    @pl.when(k < counts_ref[i])
    def _():
        col = cols_ref[i * n_k + k]
        start = pl.multiple_of(col * tk, tk)
        feat = t_ref[pl.ds(start, tk), :]          # slice of the resident slab
        acc_ref[...] += jnp.dot(ahat_ref[...], feat,
                                preferred_element_type=jnp.float32)

    @pl.when(k == n_k - 1)
    def _():
        h = jnp.maximum(acc_ref[...], 0.0)          # relu in f32 (VPU)
        o_ref[...] = jnp.dot(h.astype(w_next_ref.dtype), w_next_ref[...],
                             preferred_element_type=jnp.float32
                             ).astype(o_ref.dtype)


def gcn_layer2_pool_kernel(counts_ref, cols_ref, ahat_ref, t_ref, b_ref,
                           batch_ref, pooled_ref, acc_ref):
    """h = Ahat @ t2 + b2 fused with global_add_pool(h, batch).

    The final node features never round-trip to HBM: at the end of each row
    tile's reduction the (G_P, tm) one-hot segment mask is built in-register
    from the int32 batch ids and accumulated into the resident pooled output.
    Padded node rows carry a sentinel graph id and contribute nothing.
    """
    i = pl.program_id(0)
    k = pl.program_id(1)
    n_k = pl.num_programs(1)
    tk = ahat_ref.shape[1]
    g_pad = pooled_ref.shape[0]
    tm = acc_ref.shape[0]

    @pl.when(jnp.logical_and(i == 0, k == 0))
    def _():
        pooled_ref[...] = jnp.zeros_like(pooled_ref)

    @pl.when(k == 0)
    def _():
        acc_ref[...] = jnp.broadcast_to(b_ref[...], acc_ref.shape)

    @pl.when(k < counts_ref[i])
    def _():
        col = cols_ref[i * n_k + k]
        start = pl.multiple_of(col * tk, tk)
        feat = t_ref[pl.ds(start, tk), :]
        acc_ref[...] += jnp.dot(ahat_ref[...], feat,
                                preferred_element_type=jnp.float32)

    @pl.when(k == n_k - 1)
    def _():
        seg = jnp.broadcast_to(batch_ref[...], (g_pad, tm))
        gid = jax.lax.broadcasted_iota(jnp.int32, (g_pad, tm), 0)
        onehot = (seg == gid).astype(jnp.float32)
        pooled_ref[...] += jnp.dot(onehot, acc_ref[...],
                                   preferred_element_type=jnp.float32)


def head_kernel(pooled_ref, w_lin_ref, b_lin_ref, w_clf_ref, b_clf_ref, o_ref):
    """out = relu(pooled @ W_lin + b_lin) @ W_clf + b_clf (dropout p=0)."""
    z = jnp.dot(pooled_ref[...].astype(w_lin_ref.dtype), w_lin_ref[...],
                preferred_element_type=jnp.float32) + b_lin_ref[...]
    z = jnp.maximum(z, 0.0)
    o_ref[...] = (jnp.dot(z.astype(w_clf_ref.dtype), w_clf_ref[...],
                          preferred_element_type=jnp.float32) + b_clf_ref[...])


# ----------------------------------------------------------------------------
# Wrapper helpers
# ----------------------------------------------------------------------------
def _round_up(v, m):
    return ((v + m - 1) // m) * m


def _pad2(a, rows, cols):
    return jnp.pad(a, ((0, rows - a.shape[0]), (0, cols - a.shape[1])))


def _agg_vmem_limit(n_p, h_p, tm, tk):
    est = (2 * n_p * h_p * 2       # resident bf16 feature slab (worst-case 2 bufs)
           + 2 * tm * tk * 2       # double-buffered bf16 Ahat tiles
           + tm * h_p * 4          # f32 accumulator
           + 2 * tm * h_p * 2      # double-buffered output tile
           + 2 * h_p * h_p * 2     # resident weight / misc
           + (2 << 20))
    # TODO(synk): on v7x (64 MiB physical VMEM) very large-N configurations
    # should fall back to streamed (tk, H_P) feature tiles instead of the
    # resident slab; this cap keeps the same code valid on v5e/v6e/v7x.
    return int(min(max(est * 1.25, 32 << 20), 64 << 20))


def _build_ahat_and_blocks(edge_index, num_nodes, n_pad, tm, tk):
    """Padded bf16 Ahat (PyG gcn_norm, remaining self-loops) + compact block list.

    Everything except the single dense scatter is O(E): degrees, normalized
    edge values and the per-(tm, tk) block-nonzero structure come straight from
    edge_index (no dense pad / cast / block-reduce passes over Ahat).
    """
    src, dst = edge_index[0], edge_index[1]
    w = jnp.where(src == dst, 0.0, 1.0).astype(jnp.float32)   # drop given self-loops

    deg = jnp.zeros((n_pad,), jnp.float32).at[jnp.arange(num_nodes)].set(1.0)
    deg = deg.at[dst].add(w)                                   # + one self-loop each
    dinv = jnp.where(deg > 0, jax.lax.rsqrt(jnp.maximum(deg, 1e-12)), 0.0)

    # TODO(synk): Ahat could be stored fp8 (v7x) / int8+scale (v5e/v6e) to halve
    # the dominant HBM stream; kept bf16 here for portability.
    vals = (dinv[dst] * w * dinv[src]).astype(jnp.bfloat16)
    ahat = jnp.zeros((n_pad, n_pad), jnp.bfloat16).at[dst, src].add(vals)
    diag = jnp.arange(num_nodes)
    ahat = ahat.at[diag, diag].add((dinv[:num_nodes] ** 2).astype(jnp.bfloat16))

    n_i, n_k = n_pad // tm, n_pad // tk
    mask = jnp.zeros((n_i, n_k), jnp.bool_)
    mask = mask.at[dst // tm, src // tk].set(True)
    mask = mask.at[diag // tm, diag // tk].set(True)           # self-loop blocks

    counts = jnp.sum(mask, axis=1).astype(jnp.int32)
    order = jnp.argsort(jnp.logical_not(mask).astype(jnp.int32),
                        axis=1, stable=True).astype(jnp.int32)
    last = jnp.take_along_axis(order, jnp.maximum(counts - 1, 0)[:, None], axis=1)
    j = jnp.arange(n_k, dtype=jnp.int32)[None, :]
    # Positions past counts[i] repeat the last valid column so trailing grid
    # steps re-request the same block and their DMA is elided.
    cols = jnp.where(j < counts[:, None], order, last).astype(jnp.int32)
    return ahat, counts, cols.reshape(-1)        # cols flattened (SMEM-friendly)


# ----------------------------------------------------------------------------
# Forward wrapper
# ----------------------------------------------------------------------------
def gnn_net_graph_forward(x, edge_index, batch, num_graphs, params, *,
                          tm=512, tk=1024):
    """Padded, bf16, tiled forward pass of GNN_Net_Graph (gcn/add/float branch)."""
    n_nodes, cin = x.shape
    hidden = params["w_enc"].shape[1]
    out_ch = params["w_clf"].shape[1]

    CIN_P = _round_up(cin, 128)
    H_P = _round_up(hidden, 128)
    OUT_P = _round_up(out_ch, 128)
    G_P = _round_up(max(num_graphs, 1), 8)

    N0 = _round_up(n_nodes, 128)
    tm = min(tm, N0)
    tk = min(tk, N0)
    assert tm % 128 == 0 and tk % 128 == 0
    N_P = _round_up(N0, math.lcm(tm, tk))     # arbitrary graph sizes divide the grid
    n_i, n_k = N_P // tm, N_P // tk

    bf16 = jnp.bfloat16
    x_p = _pad2(x, N_P, CIN_P).astype(bf16)
    # Padded nodes get sentinel graph id G_P -> excluded from every pool row.
    batch_p = jnp.full((1, N_P), G_P, jnp.int32).at[0, :n_nodes].set(
        batch.astype(jnp.int32))

    ahat_p, counts, cols = _build_ahat_and_blocks(edge_index, n_nodes, N_P, tm, tk)

    w_enc = _pad2(params["w_enc"], CIN_P, H_P).astype(bf16)
    b_enc = _pad2(params["b_enc"], 1, H_P)                # biases stay f32
    w1 = _pad2(params["w1"], H_P, H_P).astype(bf16)
    b1 = _pad2(params["b1"], 1, H_P)
    w2 = _pad2(params["w2"], H_P, H_P).astype(bf16)
    b2 = _pad2(params["b2"], 1, H_P)
    w_lin = _pad2(params["w_lin"], H_P, H_P).astype(bf16)
    b_lin = _pad2(params["b_lin"], 1, H_P)
    w_clf = _pad2(params["w_clf"], H_P, OUT_P).astype(bf16)
    b_clf = _pad2(params["b_clf"], 1, OUT_P)

    # ---- Stage 1: t1 = (x @ W_enc + b_enc) @ W1, tiled over node rows -------
    t1 = pl.pallas_call(
        encode_transform_kernel,
        out_shape=jax.ShapeDtypeStruct((N_P, H_P), bf16),
        grid=(n_i,),
        in_specs=[
            pl.BlockSpec((tm, CIN_P), lambda i: (i, 0)),
            pl.BlockSpec((CIN_P, H_P), lambda i: (0, 0)),
            pl.BlockSpec((1, H_P), lambda i: (0, 0)),
            pl.BlockSpec((H_P, H_P), lambda i: (0, 0)),
        ],
        out_specs=pl.BlockSpec((tm, H_P), lambda i: (i, 0)),
        compiler_params=pltpu.CompilerParams(
            dimension_semantics=("parallel",)),
    )(x_p, w_enc, b_enc, w1)

    vmem_limit = _agg_vmem_limit(N_P, H_P, tm, tk)

    # Ahat tile column comes from the compacted nonzero-block list so empty
    # blocks are never DMA'd; features are a single resident VMEM slab.
    ahat_spec = pl.BlockSpec((tm, tk), lambda i, k, c, l: (i, l[i * n_k + k]))
    feat_spec = pl.BlockSpec((N_P, H_P), lambda i, k, c, l: (0, 0))
    bias_spec = pl.BlockSpec((1, H_P), lambda i, k, c, l: (0, 0))

    # ---- Stage 2: t2 = relu(Ahat @ t1 + b1) @ W2 -----------------------------
    t2 = pl.pallas_call(
        gcn_layer1_kernel,
        out_shape=jax.ShapeDtypeStruct((N_P, H_P), bf16),
        grid_spec=pltpu.PrefetchScalarGridSpec(
            num_scalar_prefetch=2,
            grid=(n_i, n_k),
            in_specs=[
                ahat_spec, feat_spec, bias_spec,
                pl.BlockSpec((H_P, H_P), lambda i, k, c, l: (0, 0)),   # W2
            ],
            out_specs=pl.BlockSpec((tm, H_P), lambda i, k, c, l: (i, 0)),
            scratch_shapes=[pltpu.VMEM((tm, H_P), jnp.float32)]),
        compiler_params=pltpu.CompilerParams(
            dimension_semantics=("parallel", "arbitrary"),
            vmem_limit_bytes=vmem_limit),
    )(counts, cols, ahat_p, t1, b1, w2)

    # ---- Stage 3: fused last GCN layer + global_add_pool ---------------------
    # Row axis stays "arbitrary": every row tile accumulates into the same
    # resident (G_P, H_P) pooled output block (no per-core partials needed).
    pooled = pl.pallas_call(
        gcn_layer2_pool_kernel,
        out_shape=jax.ShapeDtypeStruct((G_P, H_P), jnp.float32),
        grid_spec=pltpu.PrefetchScalarGridSpec(
            num_scalar_prefetch=2,
            grid=(n_i, n_k),
            in_specs=[
                ahat_spec, feat_spec, bias_spec,
                pl.BlockSpec((1, tm), lambda i, k, c, l: (0, i)),      # batch ids
            ],
            out_specs=pl.BlockSpec((G_P, H_P), lambda i, k, c, l: (0, 0)),
            scratch_shapes=[pltpu.VMEM((tm, H_P), jnp.float32)]),
        compiler_params=pltpu.CompilerParams(
            dimension_semantics=("arbitrary", "arbitrary"),
            vmem_limit_bytes=vmem_limit),
    )(counts, cols, ahat_p, t2, b2, batch_p)

    # ---- Stage 4: tiny head micro-kernel (Linear + ReLU + clf Linear) --------
    out_p = pl.pallas_call(
        head_kernel,
        out_shape=jax.ShapeDtypeStruct((G_P, OUT_P), jnp.float32),
    )(pooled, w_lin, b_lin, w_clf, b_clf)

    return out_p[:num_graphs, :out_ch]


# ----------------------------------------------------------------------------
# Reference / init
# ----------------------------------------------------------------------------
def build_ahat_dense(edge_index, num_nodes):
    """Dense f32 D^{-1/2}(A + I)D^{-1/2} matching PyG gcn_norm (reference only)."""
    src, dst = edge_index[0], edge_index[1]
    w = jnp.where(src == dst, 0.0, 1.0)
    A = jnp.zeros((num_nodes, num_nodes), jnp.float32).at[dst, src].add(w)
    A = A + jnp.eye(num_nodes, dtype=jnp.float32)
    deg = A.sum(axis=1)
    dinv = jnp.where(deg > 0, jax.lax.rsqrt(deg), 0.0)
    return dinv[:, None] * A * dinv[None, :]


def reference_forward(x, ahat, batch, num_graphs, params):
    """Pure-JAX f32 reference of the PyTorch forward pass."""
    h = x @ params["w_enc"] + params["b_enc"]
    h = ahat @ (h @ params["w1"]) + params["b1"]
    h = jnp.maximum(h, 0.0)
    h = ahat @ (h @ params["w2"]) + params["b2"]
    pool = (batch[None, :] == jnp.arange(num_graphs)[:, None]).astype(jnp.float32)
    g = pool @ h
    g = jnp.maximum(g @ params["w_lin"] + params["b_lin"], 0.0)
    return g @ params["w_clf"] + params["b_clf"]


def init_params(key, in_channels, hidden, out_channels):
    """Deterministic synthetic init (Linear weights stored as [in, out])."""
    ks = jax.random.split(key, 10)

    def xavier(k, fi, fo):
        b = jnp.sqrt(6.0 / (fi + fo))
        return jax.random.uniform(k, (fi, fo), jnp.float32, -b, b)

    def bias(k, fo):
        return 0.05 * jax.random.normal(k, (1, fo), jnp.float32)

    return {
        "w_enc": xavier(ks[0], in_channels, hidden), "b_enc": bias(ks[1], hidden),
        "w1": xavier(ks[2], hidden, hidden), "b1": bias(ks[3], hidden),
        "w2": xavier(ks[4], hidden, hidden), "b2": bias(ks[5], hidden),
        "w_lin": xavier(ks[6], hidden, hidden), "b_lin": bias(ks[7], hidden),
        "w_clf": xavier(ks[8], hidden, out_channels), "b_clf": bias(ks[9], out_channels),
    }


# TODO(synk): the AtomEncoder (integer-feature embedding-sum) branch of the
# PyTorch forward is not implemented; this kernel covers the float-feature
# Linear-encoder branch (gcn backbone, add pooling, dropout p=0).

if __name__ == "__main__":
    # 2 ring graphs of 150 nodes each -> N_P=384, (tm,tk)=(128,128) gives a
    # 3x3 Ahat block grid with 2 empty blocks, exercising the compacted
    # block-list DMA skip. Defaults (tm=512, tk=1024) are for realistic N.
    in_channels, hidden, out_channels = 8, 32, 4
    nodes_per_graph, num_graphs = 150, 2
    num_nodes = nodes_per_graph * num_graphs

    key = jax.random.PRNGKey(0)
    k_x, k_p = jax.random.split(key)
    x = jax.random.normal(k_x, (num_nodes, in_channels), jnp.float32)

    edges = []
    for g in range(num_graphs):
        base = g * nodes_per_graph
        for i in range(nodes_per_graph):
            a, b = base + i, base + (i + 1) % nodes_per_graph
            edges.append((a, b))
            edges.append((b, a))
    edge_index = jnp.array(edges, dtype=jnp.int32).T            # [2, E]
    batch = jnp.repeat(jnp.arange(num_graphs, dtype=jnp.int32), nodes_per_graph)

    params = init_params(k_p, in_channels, hidden, out_channels)

    fwd = jax.jit(lambda x_, e_, b_, p_: gnn_net_graph_forward(
        x_, e_, b_, num_graphs, p_, tm=128, tk=128))

    out = jax.block_until_ready(fwd(x, edge_index, batch, params))
    assert out.shape == (num_graphs, out_channels)
    assert bool(jnp.all(jnp.isfinite(out)))

    ahat = build_ahat_dense(edge_index, num_nodes)
    ref = reference_forward(x, ahat, batch, num_graphs, params)
    err = float(jnp.max(jnp.abs(out - ref)))
    scale = float(jnp.max(jnp.abs(ref)))
    assert err <= 5e-2 * scale + 5e-2, (err, scale, out, ref)

    print("KERNEL_OK")
</pallas_src>

<mosaic_0001>
module attributes {stable_mosaic.version = 11 : i64} {
  func.func @gcn_layer1_kernel(%arg0: i32, %arg1: i32, %arg2: memref<3xi32, #tpu.memory_space<smem>>, %arg3: memref<9xi32, #tpu.memory_space<smem>>, %arg4: memref<128x128xbf16, #tpu.memory_space<vmem>>, %arg5: memref<384x128xbf16, #tpu.memory_space<vmem>>, %arg6: memref<1x128xf32, #tpu.memory_space<vmem>>, %arg7: memref<128x128xbf16, #tpu.memory_space<vmem>>, %arg8: memref<128x128xbf16, #tpu.memory_space<vmem>>, %arg9: memref<128x128xf32, #tpu.memory_space<vmem>>) attributes {dimension_semantics = [#tpu.dimension_semantics<parallel>, #tpu.dimension_semantics<arbitrary>], iteration_bounds = array<i64: 3, 3>, scalar_prefetch = 2 : i64, scratch_operands = 1 : i64, tpu.core_type = #tpu.core_type<tc>, window_params = [{transform_indices = @transform_0, window_bounds = array<i64: 128, 128>}, {pipeline_mode = #tpu.pipeline_mode<synchronous>, transform_indices = @transform_1, window_bounds = array<i64: 384, 128>}, {pipeline_mode = #tpu.pipeline_mode<synchronous>, transform_indices = @transform_2, window_bounds = array<i64: 1, 128>}, {pipeline_mode = #tpu.pipeline_mode<synchronous>, transform_indices = @transform_3, window_bounds = array<i64: 128, 128>}, {transform_indices = @transform_4, window_bounds = array<i64: 128, 128>}]} {
    %c0_i32 = arith.constant 0 : i32
    %0 = arith.cmpi eq, %arg1, %c0_i32 : i32
    %1 = arith.extui %0 : i1 to i32
    %c0_i32_0 = arith.constant 0 : i32
    %2 = arith.cmpi ne, %1, %c0_i32_0 : i32
    scf.if %2 {
      %c0 = arith.constant 0 : index
      %c0_3 = arith.constant 0 : index
      %11 = vector.load %arg6[%c0, %c0_3] : memref<1x128xf32, #tpu.memory_space<vmem>>, vector<1x128xf32>
      %12 = vector.shape_cast %11 : vector<1x128xf32> to vector<1x128xf32>
      %13 = vector.broadcast %12 : vector<1x128xf32> to vector<128x128xf32>
      %c0_4 = arith.constant 0 : index
      %c0_5 = arith.constant 0 : index
      %14 = vector.load %arg9[%c0_4, %c0_5] : memref<128x128xf32, #tpu.memory_space<vmem>>, vector<128x128xf32>
      tpu.vector_store %arg9[%c0_4, %c0_5], %13 {strides = array<i32>} : memref<128x128xf32, #tpu.memory_space<vmem>>, vector<128x128xf32>,
    } else {
    }
    %3 = arith.index_cast %arg0 : i32 to index
    %4 = memref.load %arg2[%3] : memref<3xi32, #tpu.memory_space<smem>>
    %5 = arith.cmpi slt, %arg1, %4 : i32
    %6 = arith.extui %5 : i1 to i32
    %c0_i32_1 = arith.constant 0 : i32
    %7 = arith.cmpi ne, %6, %c0_i32_1 : i32
    scf.if %7 {
      %c3_i32 = arith.constant 3 : i32
      %11 = arith.muli %arg0, %c3_i32 : i32
      %12 = arith.addi %11, %arg1 : i32
      %13 = arith.index_cast %12 : i32 to index
      %14 = memref.load %arg3[%13] : memref<9xi32, #tpu.memory_space<smem>>
      %c128_i32 = arith.constant 128 : i32
      %15 = arith.muli %14, %c128_i32 : i32
      %16 = tpu.assume_multiple %15, 128 : i32
      %17 = arith.index_cast %16 : i32 to index
      %c0 = arith.constant 0 : index
      %18 = vector.load %arg5[%17, %c0] : memref<384x128xbf16, #tpu.memory_space<vmem>>, vector<128x128xbf16>
      %c0_3 = arith.constant 0 : index
      %c0_4 = arith.constant 0 : index
      %19 = vector.load %arg9[%c0_3, %c0_4] : memref<128x128xf32, #tpu.memory_space<vmem>>, vector<128x128xf32>
      %c0_5 = arith.constant 0 : index
      %c0_6 = arith.constant 0 : index
      %20 = vector.load %arg4[%c0_5, %c0_6] : memref<128x128xbf16, #tpu.memory_space<vmem>>, vector<128x128xbf16>
      %cst = arith.constant dense<0.000000e+00> : vector<128x128xf32>
      %21 = tpu.matmul %20, %18, %cst {dimension_numbers = #tpu.dot_dimension_numbers<[1], [0], [0], [1], [0, 0, 1, 1], [], []>} : vector<128x128xbf16>, vector<128x128xbf16>, vector<128x128xf32> -> vector<128x128xf32>
      %22 = arith.addf %19, %21 : vector<128x128xf32>
      %c0_7 = arith.constant 0 : index
      %c0_8 = arith.constant 0 : index
      %23 = vector.load %arg9[%c0_7, %c0_8] : memref<128x128xf32, #tpu.memory_space<vmem>>, vector<128x128xf32>
      tpu.vector_store %arg9[%c0_7, %c0_8], %22 {strides = array<i32>} : memref<128x128xf32, #tpu.memory_space<vmem>>, vector<128x128xf32>,
    } else {
    }
    %c2_i32 = arith.constant 2 : i32
    %8 = arith.cmpi eq, %arg1, %c2_i32 : i32
    %9 = arith.extui %8 : i1 to i32
    %c0_i32_2 = arith.constant 0 : i32
    %10 = arith.cmpi ne, %9, %c0_i32_2 : i32
    scf.if %10 {
      %c0 = arith.constant 0 : index
      %c0_3 = arith.constant 0 : index
      %11 = vector.load %arg9[%c0, %c0_3] : memref<128x128xf32, #tpu.memory_space<vmem>>, vector<128x128xf32>
      %cst = arith.constant 0.000000e+00 : f32
      %12 = vector.broadcast %cst : f32 to vector<128x128xf32>
      %13 = arith.maximumf %11, %12 : vector<128x128xf32>
      %14 = arith.truncf %13 : vector<128x128xf32> to vector<128x128xbf16>
      %c0_4 = arith.constant 0 : index
      %c0_5 = arith.constant 0 : index
      %15 = vector.load %arg7[%c0_4, %c0_5] : memref<128x128xbf16, #tpu.memory_space<vmem>>, vector<128x128xbf16>
      %cst_6 = arith.constant dense<0.000000e+00> : vector<128x128xf32>
      %16 = tpu.matmul %14, %15, %cst_6 {dimension_numbers = #tpu.dot_dimension_numbers<[1], [0], [0], [1], [0, 0, 1, 1], [], []>} : vector<128x128xbf16>, vector<128x128xbf16>, vector<128x128xf32> -> vector<128x128xf32>
      %17 = arith.truncf %16 : vector<128x128xf32> to vector<128x128xbf16>
      %c0_7 = arith.constant 0 : index
      %c0_8 = arith.constant 0 : index
      %18 = vector.load %arg8[%c0_7, %c0_8] : memref<128x128xbf16, #tpu.memory_space<vmem>>, vector<128x128xbf16>
      tpu.vector_store %arg8[%c0_7, %c0_8], %17 {strides = array<i32>} : memref<128x128xbf16, #tpu.memory_space<vmem>>, vector<128x128xbf16>,
    } else {
    }
    return
  }
  func.func @transform_0(%arg0: i32, %arg1: i32, %arg2: memref<3xi32, #tpu.memory_space<smem>>, %arg3: memref<9xi32, #tpu.memory_space<smem>>) -> (i32, i32) {
    %c3_i32 = arith.constant 3 : i32
    %0 = arith.muli %arg0, %c3_i32 : i32
    %1 = arith.addi %0, %arg1 : i32
    %2 = arith.index_cast %1 : i32 to index
    %3 = memref.load %arg3[%2] : memref<9xi32, #tpu.memory_space<smem>>
    %c0_i32 = arith.constant 0 : i32
    return %arg0, %3 : i32, i32
  }
  func.func @transform_1(%arg0: i32, %arg1: i32, %arg2: memref<3xi32, #tpu.memory_space<smem>>, %arg3: memref<9xi32, #tpu.memory_space<smem>>) -> (i32, i32) {
    %c0_i32 = arith.constant 0 : i32
    %c0_i32_0 = arith.constant 0 : i32
    %c0_i32_1 = arith.constant 0 : i32
    return %c0_i32, %c0_i32_0 : i32, i32
  }
  func.func @transform_2(%arg0: i32, %arg1: i32, %arg2: memref<3xi32, #tpu.memory_space<smem>>, %arg3: memref<9xi32, #tpu.memory_space<smem>>) -> (i32, i32) {
    %c0_i32 = arith.constant 0 : i32
    %c0_i32_0 = arith.constant 0 : i32
    %c0_i32_1 = arith.constant 0 : i32
    return %c0_i32, %c0_i32_0 : i32, i32
  }
  func.func @transform_3(%arg0: i32, %arg1: i32, %arg2: memref<3xi32, #tpu.memory_space<smem>>, %arg3: memref<9xi32, #tpu.memory_space<smem>>) -> (i32, i32) {
    %c0_i32 = arith.constant 0 : i32
    %c0_i32_0 = arith.constant 0 : i32
    %c0_i32_1 = arith.constant 0 : i32
    return %c0_i32, %c0_i32_0 : i32, i32
  }
  func.func @transform_4(%arg0: i32, %arg1: i32, %arg2: memref<3xi32, #tpu.memory_space<smem>>, %arg3: memref<9xi32, #tpu.memory_space<smem>>) -> (i32, i32) {
    %c0_i32 = arith.constant 0 : i32
    %c0_i32_0 = arith.constant 0 : i32
    return %arg0, %c0_i32 : i32, i32
  }
}

module attributes {stable_mosaic.version = 11 : i64} {
  func.func @encode_transform_kernel(%arg0: i32, %arg1: memref<128x128xbf16, #tpu.memory_space<vmem>>, %arg2: memref<128x128xbf16, #tpu.memory_space<vmem>>, %arg3: memref<1x128xf32, #tpu.memory_space<vmem>>, %arg4: memref<128x128xbf16, #tpu.memory_space<vmem>>, %arg5: memref<128x128xbf16, #tpu.memory_space<vmem>>) attributes {dimension_semantics = [#tpu.dimension_semantics<parallel>], iteration_bounds = array<i64: 3>, scalar_prefetch = 0 : i64, scratch_operands = 0 : i64, tpu.core_type = #tpu.core_type<tc>, window_params = [{transform_indices = @transform_0, window_bounds = array<i64: 128, 128>}, {pipeline_mode = #tpu.pipeline_mode<synchronous>, transform_indices = @transform_1, window_bounds = array<i64: 128, 128>}, {pipeline_mode = #tpu.pipeline_mode<synchronous>, transform_indices = @transform_2, window_bounds = array<i64: 1, 128>}, {pipeline_mode = #tpu.pipeline_mode<synchronous>, transform_indices = @transform_3, window_bounds = array<i64: 128, 128>}, {transform_indices = @transform_4, window_bounds = array<i64: 128, 128>}]} {
    %c0 = arith.constant 0 : index
    %c0_0 = arith.constant 0 : index
    %0 = vector.load %arg1[%c0, %c0_0] : memref<128x128xbf16, #tpu.memory_space<vmem>>, vector<128x128xbf16>
    %c0_1 = arith.constant 0 : index
    %c0_2 = arith.constant 0 : index
    %1 = vector.load %arg2[%c0_1, %c0_2] : memref<128x128xbf16, #tpu.memory_space<vmem>>, vector<128x128xbf16>
    %cst = arith.constant dense<0.000000e+00> : vector<128x128xf32>
    %2 = tpu.matmul %0, %1, %cst {dimension_numbers = #tpu.dot_dimension_numbers<[1], [0], [0], [1], [0, 0, 1, 1], [], []>} : vector<128x128xbf16>, vector<128x128xbf16>, vector<128x128xf32> -> vector<128x128xf32>
    %c0_3 = arith.constant 0 : index
    %c0_4 = arith.constant 0 : index
    %3 = vector.load %arg3[%c0_3, %c0_4] : memref<1x128xf32, #tpu.memory_space<vmem>>, vector<1x128xf32>
    %4 = vector.broadcast %3 : vector<1x128xf32> to vector<128x128xf32>
    %5 = arith.addf %2, %4 : vector<128x128xf32>
    %6 = arith.truncf %5 : vector<128x128xf32> to vector<128x128xbf16>
    %c0_5 = arith.constant 0 : index
    %c0_6 = arith.constant 0 : index
    %7 = vector.load %arg4[%c0_5, %c0_6] : memref<128x128xbf16, #tpu.memory_space<vmem>>, vector<128x128xbf16>
    %cst_7 = arith.constant dense<0.000000e+00> : vector<128x128xf32>
    %8 = tpu.matmul %6, %7, %cst_7 {dimension_numbers = #tpu.dot_dimension_numbers<[1], [0], [0], [1], [0, 0, 1, 1], [], []>} : vector<128x128xbf16>, vector<128x128xbf16>, vector<128x128xf32> -> vector<128x128xf32>
    %9 = arith.truncf %8 : vector<128x128xf32> to vector<128x128xbf16>
    %c0_8 = arith.constant 0 : index
    %c0_9 = arith.constant 0 : index
    %10 = vector.load %arg5[%c0_8, %c0_9] : memref<128x128xbf16, #tpu.memory_space<vmem>>, vector<128x128xbf16>
    tpu.vector_store %arg5[%c0_8, %c0_9], %9 {strides = array<i32>} : memref<128x128xbf16, #tpu.memory_space<vmem>>, vector<128x128xbf16>,
    return
  }
  func.func @transform_0(%arg0: i32) -> (i32, i32) {
    %c0_i32 = arith.constant 0 : i32
    %c0_i32_0 = arith.constant 0 : i32
    return %arg0, %c0_i32 : i32, i32
  }
  func.func @transform_1(%arg0: i32) -> (i32, i32) {
    %c0_i32 = arith.constant 0 : i32
    %c0_i32_0 = arith.constant 0 : i32
    %c0_i32_1 = arith.constant 0 : i32
    return %c0_i32, %c0_i32_0 : i32, i32
  }
  func.func @transform_2(%arg0: i32) -> (i32, i32) {
    %c0_i32 = arith.constant 0 : i32
    %c0_i32_0 = arith.constant 0 : i32
    %c0_i32_1 = arith.constant 0 : i32
    return %c0_i32, %c0_i32_0 : i32, i32
  }
  func.func @transform_3(%arg0: i32) -> (i32, i32) {
    %c0_i32 = arith.constant 0 : i32
    %c0_i32_0 = arith.constant 0 : i32
    %c0_i32_1 = arith.constant 0 : i32
    return %c0_i32, %c0_i32_0 : i32, i32
  }
  func.func @transform_4(%arg0: i32) -> (i32, i32) {
    %c0_i32 = arith.constant 0 : i32
    %c0_i32_0 = arith.constant 0 : i32
    return %arg0, %c0_i32 : i32, i32
  }
}

module attributes {stable_mosaic.version = 11 : i64} {
  func.func @gcn_layer2_pool_kernel(%arg0: i32, %arg1: i32, %arg2: memref<3xi32, #tpu.memory_space<smem>>, %arg3: memref<9xi32, #tpu.memory_space<smem>>, %arg4: memref<128x128xbf16, #tpu.memory_space<vmem>>, %arg5: memref<384x128xbf16, #tpu.memory_space<vmem>>, %arg6: memref<1x128xf32, #tpu.memory_space<vmem>>, %arg7: memref<1x128xi32, #tpu.memory_space<vmem>>, %arg8: memref<8x128xf32, #tpu.memory_space<vmem>>, %arg9: memref<128x128xf32, #tpu.memory_space<vmem>>) attributes {dimension_semantics = [#tpu.dimension_semantics<arbitrary>, #tpu.dimension_semantics<arbitrary>], iteration_bounds = array<i64: 3, 3>, scalar_prefetch = 2 : i64, scratch_operands = 1 : i64, tpu.core_type = #tpu.core_type<tc>, window_params = [{transform_indices = @transform_0, window_bounds = array<i64: 128, 128>}, {pipeline_mode = #tpu.pipeline_mode<synchronous>, transform_indices = @transform_1, window_bounds = array<i64: 384, 128>}, {pipeline_mode = #tpu.pipeline_mode<synchronous>, transform_indices = @transform_2, window_bounds = array<i64: 1, 128>}, {transform_indices = @transform_3, window_bounds = array<i64: 1, 128>}, {pipeline_mode = #tpu.pipeline_mode<synchronous>, transform_indices = @transform_4, window_bounds = array<i64: 8, 128>}]} {
    %c0_i32 = arith.constant 0 : i32
    %0 = arith.cmpi eq, %arg0, %c0_i32 : i32
    %c0_i32_0 = arith.constant 0 : i32
    %1 = arith.cmpi eq, %arg1, %c0_i32_0 : i32
    %2 = arith.andi %0, %1 : i1
    %3 = arith.extui %2 : i1 to i32
    %c0_i32_1 = arith.constant 0 : i32
    %4 = arith.cmpi ne, %3, %c0_i32_1 : i32
    scf.if %4 {
      %cst = arith.constant 0.000000e+00 : f32
      %16 = vector.broadcast %cst : f32 to vector<8x128xf32>
      %c0 = arith.constant 0 : index
      %c0_6 = arith.constant 0 : index
      %17 = vector.load %arg8[%c0, %c0_6] : memref<8x128xf32, #tpu.memory_space<vmem>>, vector<8x128xf32>
      tpu.vector_store %arg8[%c0, %c0_6], %16 {strides = array<i32>} : memref<8x128xf32, #tpu.memory_space<vmem>>, vector<8x128xf32>,
    } else {
    }
    %c0_i32_2 = arith.constant 0 : i32
    %5 = arith.cmpi eq, %arg1, %c0_i32_2 : i32
    %6 = arith.extui %5 : i1 to i32
    %c0_i32_3 = arith.constant 0 : i32
    %7 = arith.cmpi ne, %6, %c0_i32_3 : i32
    scf.if %7 {
      %c0 = arith.constant 0 : index
      %c0_6 = arith.constant 0 : index
      %16 = vector.load %arg6[%c0, %c0_6] : memref<1x128xf32, #tpu.memory_space<vmem>>, vector<1x128xf32>
      %17 = vector.shape_cast %16 : vector<1x128xf32> to vector<1x128xf32>
      %18 = vector.broadcast %17 : vector<1x128xf32> to vector<128x128xf32>
      %c0_7 = arith.constant 0 : index
      %c0_8 = arith.constant 0 : index
      %19 = vector.load %arg9[%c0_7, %c0_8] : memref<128x128xf32, #tpu.memory_space<vmem>>, vector<128x128xf32>
      tpu.vector_store %arg9[%c0_7, %c0_8], %18 {strides = array<i32>} : memref<128x128xf32, #tpu.memory_space<vmem>>, vector<128x128xf32>,
    } else {
    }
    %8 = arith.index_cast %arg0 : i32 to index
    %9 = memref.load %arg2[%8] : memref<3xi32, #tpu.memory_space<smem>>
    %10 = arith.cmpi slt, %arg1, %9 : i32
    %11 = arith.extui %10 : i1 to i32
    %c0_i32_4 = arith.constant 0 : i32
    %12 = arith.cmpi ne, %11, %c0_i32_4 : i32
    scf.if %12 {
      %c3_i32 = arith.constant 3 : i32
      %16 = arith.muli %arg0, %c3_i32 : i32
      %17 = arith.addi %16, %arg1 : i32
      %18 = arith.index_cast %17 : i32 to index
      %19 = memref.load %arg3[%18] : memref<9xi32, #tpu.memory_space<smem>>
      %c128_i32 = arith.constant 128 : i32
      %20 = arith.muli %19, %c128_i32 : i32
      %21 = tpu.assume_multiple %20, 128 : i32
      %22 = arith.index_cast %21 : i32 to index
      %c0 = arith.constant 0 : index
      %23 = vector.load %arg5[%22, %c0] : memref<384x128xbf16, #tpu.memory_space<vmem>>, vector<128x128xbf16>
      %c0_6 = arith.constant 0 : index
      %c0_7 = arith.constant 0 : index
      %24 = vector.load %arg9[%c0_6, %c0_7] : memref<128x128xf32, #tpu.memory_space<vmem>>, vector<128x128xf32>
      %c0_8 = arith.constant 0 : index
      %c0_9 = arith.constant 0 : index
      %25 = vector.load %arg4[%c0_8, %c0_9] : memref<128x128xbf16, #tpu.memory_space<vmem>>, vector<128x128xbf16>
      %cst = arith.constant dense<0.000000e+00> : vector<128x128xf32>
      %26 = tpu.matmul %25, %23, %cst {dimension_numbers = #tpu.dot_dimension_numbers<[1], [0], [0], [1], [0, 0, 1, 1], [], []>} : vector<128x128xbf16>, vector<128x128xbf16>, vector<128x128xf32> -> vector<128x128xf32>
      %27 = arith.addf %24, %26 : vector<128x128xf32>
      %c0_10 = arith.constant 0 : index
      %c0_11 = arith.constant 0 : index
      %28 = vector.load %arg9[%c0_10, %c0_11] : memref<128x128xf32, #tpu.memory_space<vmem>>, vector<128x128xf32>
      tpu.vector_store %arg9[%c0_10, %c0_11], %27 {strides = array<i32>} : memref<128x128xf32, #tpu.memory_space<vmem>>, vector<128x128xf32>,
    } else {
    }
    %c2_i32 = arith.constant 2 : i32
    %13 = arith.cmpi eq, %arg1, %c2_i32 : i32
    %14 = arith.extui %13 : i1 to i32
    %c0_i32_5 = arith.constant 0 : i32
    %15 = arith.cmpi ne, %14, %c0_i32_5 : i32
    scf.if %15 {
      %c0 = arith.constant 0 : index
      %c0_6 = arith.constant 0 : index
      %16 = vector.load %arg7[%c0, %c0_6] : memref<1x128xi32, #tpu.memory_space<vmem>>, vector<1x128xi32>
      %17 = vector.shape_cast %16 : vector<1x128xi32> to vector<1x128xi32>
      %18 = vector.broadcast %17 : vector<1x128xi32> to vector<8x128xi32>
      %19 = tpu.iota {dimensions = array<i32: 0>} : vector<8x128xi32>
      %20 = arith.cmpi eq, %18, %19 : vector<8x128xi32>
      %21 = arith.extui %20 : vector<8x128xi1> to vector<8x128xi32>
      %22 = arith.sitofp %21 : vector<8x128xi32> to vector<8x128xf32>
      %c0_7 = arith.constant 0 : index
      %c0_8 = arith.constant 0 : index
      %23 = vector.load %arg8[%c0_7, %c0_8] : memref<8x128xf32, #tpu.memory_space<vmem>>, vector<8x128xf32>
      %c0_9 = arith.constant 0 : index
      %c0_10 = arith.constant 0 : index
      %24 = vector.load %arg9[%c0_9, %c0_10] : memref<128x128xf32, #tpu.memory_space<vmem>>, vector<128x128xf32>
      %cst = arith.constant dense<0.000000e+00> : vector<8x128xf32>
      %25 = tpu.matmul %22, %24, %cst {dimension_numbers = #tpu.dot_dimension_numbers<[1], [0], [0], [1], [0, 0, 1, 1], [], []>} : vector<8x128xf32>, vector<128x128xf32>, vector<8x128xf32> -> vector<8x128xf32>
      %26 = arith.addf %23, %25 : vector<8x128xf32>
      %c0_11 = arith.constant 0 : index
      %c0_12 = arith.constant 0 : index
      %27 = vector.load %arg8[%c0_11, %c0_12] : memref<8x128xf32, #tpu.memory_space<vmem>>, vector<8x128xf32>
      tpu.vector_store %arg8[%c0_11, %c0_12], %26 {strides = array<i32>} : memref<8x128xf32, #tpu.memory_space<vmem>>, vector<8x128xf32>,
    } else {
    }
    return
  }
  func.func @transform_0(%arg0: i32, %arg1: i32, %arg2: memref<3xi32, #tpu.memory_space<smem>>, %arg3: memref<9xi32, #tpu.memory_space<smem>>) -> (i32, i32) {
    %c3_i32 = arith.constant 3 : i32
    %0 = arith.muli %arg0, %c3_i32 : i32
    %1 = arith.addi %0, %arg1 : i32
    %2 = arith.index_cast %1 : i32 to index
    %3 = memref.load %arg3[%2] : memref<9xi32, #tpu.memory_space<smem>>
    %c0_i32 = arith.constant 0 : i32
    return %arg0, %3 : i32, i32
  }
  func.func @transform_1(%arg0: i32, %arg1: i32, %arg2: memref<3xi32, #tpu.memory_space<smem>>, %arg3: memref<9xi32, #tpu.memory_space<smem>>) -> (i32, i32) {
    %c0_i32 = arith.constant 0 : i32
    %c0_i32_0 = arith.constant 0 : i32
    %c0_i32_1 = arith.constant 0 : i32
    return %c0_i32, %c0_i32_0 : i32, i32
  }
  func.func @transform_2(%arg0: i32, %arg1: i32, %arg2: memref<3xi32, #tpu.memory_space<smem>>, %arg3: memref<9xi32, #tpu.memory_space<smem>>) -> (i32, i32) {
    %c0_i32 = arith.constant 0 : i32
    %c0_i32_0 = arith.constant 0 : i32
    %c0_i32_1 = arith.constant 0 : i32
    return %c0_i32, %c0_i32_0 : i32, i32
  }
  func.func @transform_3(%arg0: i32, %arg1: i32, %arg2: memref<3xi32, #tpu.memory_space<smem>>, %arg3: memref<9xi32, #tpu.memory_space<smem>>) -> (i32, i32) {
    %c0_i32 = arith.constant 0 : i32
    %c0_i32_0 = arith.constant 0 : i32
    return %c0_i32, %arg0 : i32, i32
  }
  func.func @transform_4(%arg0: i32, %arg1: i32, %arg2: memref<3xi32, #tpu.memory_space<smem>>, %arg3: memref<9xi32, #tpu.memory_space<smem>>) -> (i32, i32) {
    %c0_i32 = arith.constant 0 : i32
    %c0_i32_0 = arith.constant 0 : i32
    %c0_i32_1 = arith.constant 0 : i32
    return %c0_i32, %c0_i32_0 : i32, i32
  }
}

module attributes {stable_mosaic.version = 11 : i64} {
  func.func @head_kernel(%arg0: memref<8x128xf32, #tpu.memory_space<vmem>>, %arg1: memref<128x128xbf16, #tpu.memory_space<vmem>>, %arg2: memref<1x128xf32, #tpu.memory_space<vmem>>, %arg3: memref<128x128xbf16, #tpu.memory_space<vmem>>, %arg4: memref<1x128xf32, #tpu.memory_space<vmem>>, %arg5: memref<8x128xf32, #tpu.memory_space<vmem>>) attributes {dimension_semantics = [], scalar_prefetch = 0 : i64, scratch_operands = 0 : i64, tpu.core_type = #tpu.core_type<tc>} {
    %c0 = arith.constant 0 : index
    %c0_0 = arith.constant 0 : index
    %0 = vector.load %arg0[%c0, %c0_0] : memref<8x128xf32, #tpu.memory_space<vmem>>, vector<8x128xf32>
    %1 = arith.truncf %0 : vector<8x128xf32> to vector<8x128xbf16>
    %c0_1 = arith.constant 0 : index
    %c0_2 = arith.constant 0 : index
    %2 = vector.load %arg1[%c0_1, %c0_2] : memref<128x128xbf16, #tpu.memory_space<vmem>>, vector<128x128xbf16>
    %cst = arith.constant dense<0.000000e+00> : vector<8x128xf32>
    %3 = tpu.matmul %1, %2, %cst {dimension_numbers = #tpu.dot_dimension_numbers<[1], [0], [0], [1], [0, 0, 1, 1], [], []>} : vector<8x128xbf16>, vector<128x128xbf16>, vector<8x128xf32> -> vector<8x128xf32>
    %c0_3 = arith.constant 0 : index
    %c0_4 = arith.constant 0 : index
    %4 = vector.load %arg2[%c0_3, %c0_4] : memref<1x128xf32, #tpu.memory_space<vmem>>, vector<1x128xf32>
    %5 = vector.broadcast %4 : vector<1x128xf32> to vector<8x128xf32>
    %6 = arith.addf %3, %5 : vector<8x128xf32>
    %cst_5 = arith.constant 0.000000e+00 : f32
    %7 = vector.broadcast %cst_5 : f32 to vector<8x128xf32>
    %8 = arith.maximumf %6, %7 : vector<8x128xf32>
    %9 = arith.truncf %8 : vector<8x128xf32> to vector<8x128xbf16>
    %c0_6 = arith.constant 0 : index
    %c0_7 = arith.constant 0 : index
    %10 = vector.load %arg3[%c0_6, %c0_7] : memref<128x128xbf16, #tpu.memory_space<vmem>>, vector<128x128xbf16>
    %cst_8 = arith.constant dense<0.000000e+00> : vector<8x128xf32>
    %11 = tpu.matmul %9, %10, %cst_8 {dimension_numbers = #tpu.dot_dimension_numbers<[1], [0], [0], [1], [0, 0, 1, 1], [], []>} : vector<8x128xbf16>, vector<128x128xbf16>, vector<8x128xf32> -> vector<8x128xf32>
    %c0_9 = arith.constant 0 : index
    %c0_10 = arith.constant 0 : index
    %12 = vector.load %arg4[%c0_9, %c0_10] : memref<1x128xf32, #tpu.memory_space<vmem>>, vector<1x128xf32>
    %13 = vector.broadcast %12 : vector<1x128xf32> to vector<8x128xf32>
    %14 = arith.addf %11, %13 : vector<8x128xf32>
    %c0_11 = arith.constant 0 : index
    %c0_12 = arith.constant 0 : index
    %15 = vector.load %arg5[%c0_11, %c0_12] : memref<8x128xf32, #tpu.memory_space<vmem>>, vector<8x128xf32>
    tpu.vector_store %arg5[%c0_11, %c0_12], %14 {strides = array<i32>} : memref<8x128xf32, #tpu.memory_space<vmem>>, vector<8x128xf32>,
    return
  }
}

</mosaic_0001>

<llo_original>
// kernel: _lambda_.4
$region0: #{_lambda_.4}
  #allocation0 [shape = 'u32[]', space=smem, size = 0x4, offset = 0x4, fixed_abs, tag = 'smem constant byte address 0x4 - core index']
  #allocation1 [shape = 'u32[72,128]{1,0:T(1,128)}', space=vmem, size = 0x9000, scoped, tag = 'internal scratch']
  %s0 = inlined_call_operand.vmem [shape: bf16[384,128], index: 0, kind: input, shape index: {}]
  %s1 = inlined_call_operand.vmem [shape: bf16[128,128], index: 1, kind: input, shape index: {}]
  %s2 = inlined_call_operand.vmem [shape: f32[1,128], index: 2, kind: input, shape index: {}]
  %s3 = inlined_call_operand.vmem [shape: bf16[128,128], index: 3, kind: input, shape index: {}]
  %s4 = inlined_call_operand.vmem [shape: bf16[384,128], index: 4, kind: output, shape index: {}]
  %s5 = sld [smem:[#allocation0]]
  $region49: #{_lambda_.4} parent=0
    _
  %s7 = ssub.s32 1, %s5
  %s8 = scalar_select 0, %s7, %s5
  loop: start=0, step=1, limit=5
  $region2: #{_lambda_.4} parent=0 // loop_pre_header
    _
  $region3: #{_lambda_.4} parent=0 // loop_header
    %s10 = sphi 0, %s14
    %p11 = scmp.ge.s32.totalorder %s10, 5
    %s20 = sphi 0, %s22
    %s23 = sphi 0, %s20
    %s24 = sphi 0, %s23
    %s40 = sphi 0, %s24
    %s44 = sphi 0, %s44
    %s46 = sphi 0, %s44
    %s47 = sphi 0, %s46
    %s61 = sphi 0, %s47
    %s65 = sphi 0, %s65
    %s67 = sphi 0, %s65
    %s68 = sphi 0, %s67
    %s82 = sphi 0, %s68
    %s86 = sphi 0, %s86
    %s88 = sphi 0, %s86
    %s89 = sphi 0, %s88
    %s103 = sphi 0, %s89
    %s109 = sphi 0, %s111
    %s112 = sphi 0, %s109
    %s113 = sphi 0, %s112
    %s129 = sphi 0, %s113
  $region4: #{_lambda_.4} parent=0 // loop_header_branch
    %13 = sbr.rel (%p11) target = $region8
  $region5: #{_lambda_.4} parent=0 // loop_body
    %s15 = ssub.s32 %s10, 1
    %s16 = ssub.s32 %s10, 2
    %s17 = sadd.s32 %s10, 1
    %s18 = ssub.s32 %s10, %s17
    %p19 = scmp.eq.s32.totalorder %s18, 0
    %s21 = sadd.s32 %s20, 1
    %s22 = scalar_select %p19, %s20, %s21
    %p25 = pneg %p19
    %p26 = scmp.eq.s32.totalorder %s10, 2
    %p27 = por %p25, %p26
    %p28 = scmp.ne.s32.totalorder %s20, %s23
    %p29 = scmp.eq.s32.totalorder %s10, 0
    %p30 = por %p28, %p29
    %p31 = scmp.ne.s32.totalorder %s20, %s23
    %p32 = scmp.eq.s32.totalorder %s15, 2
    %p33 = por %p31, %p32
    %p34 = scmp.ne.s32.totalorder %s23, %s24
    %p35 = scmp.eq.s32.totalorder %s15, 0
    %p36 = por %p34, %p35
    %p37 = scmp.ne.s32.totalorder %s23, %s24
    %p38 = scmp.eq.s32.totalorder %s16, 2
    %p39 = por %p37, %p38
    %p41 = scmp.ne.s32.totalorder %s24, %s40
    %p42 = scmp.eq.s32.totalorder %s16, 0
    %p43 = por %p41, %p42
    %s45 = sadd.s32 %s44, 1
    %p48 = scmp.eq.s32.totalorder %s10, 2
    %p49 = scmp.ne.s32.totalorder %s44, %s46
    %p50 = scmp.eq.s32.totalorder %s10, 0
    %p51 = por %p49, %p50
    %p52 = scmp.ne.s32.totalorder %s44, %s46
    %p53 = scmp.eq.s32.totalorder %s15, 2
    %p54 = por %p52, %p53
    %p55 = scmp.ne.s32.totalorder %s46, %s47
    %p56 = scmp.eq.s32.totalorder %s15, 0
    %p57 = por %p55, %p56
    %p58 = scmp.ne.s32.totalorder %s46, %s47
    %p59 = scmp.eq.s32.totalorder %s16, 2
    %p60 = por %p58, %p59
    %p62 = scmp.ne.s32.totalorder %s47, %s61
    %p63 = scmp.eq.s32.totalorder %s16, 0
    %p64 = por %p62, %p63
    %s66 = sadd.s32 %s65, 1
    %p69 = scmp.eq.s32.totalorder %s10, 2
    %p70 = scmp.ne.s32.totalorder %s65, %s67
    %p71 = scmp.eq.s32.totalorder %s10, 0
    %p72 = por %p70, %p71
    %p73 = scmp.ne.s32.totalorder %s65, %s67
    %p74 = scmp.eq.s32.totalorder %s15, 2
    %p75 = por %p73, %p74
    %p76 = scmp.ne.s32.totalorder %s67, %s68
    %p77 = scmp.eq.s32.totalorder %s15, 0
    %p78 = por %p76, %p77
    %p79 = scmp.ne.s32.totalorder %s67, %s68
    %p80 = scmp.eq.s32.totalorder %s16, 2
    %p81 = por %p79, %p80
    %p83 = scmp.ne.s32.totalorder %s68, %s82
    %p84 = scmp.eq.s32.totalorder %s16, 0
    %p85 = por %p83, %p84
    %s87 = sadd.s32 %s86, 1
    %p90 = scmp.eq.s32.totalorder %s10, 2
    %p91 = scmp.ne.s32.totalorder %s86, %s88
    %p92 = scmp.eq.s32.totalorder %s10, 0
    %p93 = por %p91, %p92
    %p94 = scmp.ne.s32.totalorder %s86, %s88
    %p95 = scmp.eq.s32.totalorder %s15, 2
    %p96 = por %p94, %p95
    %p97 = scmp.ne.s32.totalorder %s88, %s89
    %p98 = scmp.eq.s32.totalorder %s15, 0
    %p99 = por %p97, %p98
    %p100 = scmp.ne.s32.totalorder %s88, %s89
    %p101 = scmp.eq.s32.totalorder %s16, 2
    %p102 = por %p100, %p101
    %p104 = scmp.ne.s32.totalorder %s89, %s103
    %p105 = scmp.eq.s32.totalorder %s16, 0
    %p106 = por %p104, %p105
    %s107 = ssub.s32 %s10, %s17
    %p108 = scmp.eq.s32.totalorder %s107, 0
    %s110 = sadd.s32 %s109, 1
    %s111 = scalar_select %p108, %s109, %s110
    %p114 = pneg %p108
    %p115 = scmp.eq.s32.totalorder %s10, 2
    %p116 = por %p114, %p115
    %p117 = scmp.ne.s32.totalorder %s109, %s112
    %p118 = scmp.eq.s32.totalorder %s10, 0
    %p119 = por %p117, %p118
    %p120 = scmp.ne.s32.totalorder %s109, %s112
    %p121 = scmp.eq.s32.totalorder %s15, 2
    %p122 = por %p120, %p121
    %p123 = scmp.ne.s32.totalorder %s112, %s113
    %p124 = scmp.eq.s32.totalorder %s15, 0
    %p125 = por %p123, %p124
    %p126 = scmp.ne.s32.totalorder %s112, %s113
    %p127 = scmp.eq.s32.totalorder %s16, 2
    %p128 = por %p126, %p127
    %p130 = scmp.ne.s32.totalorder %s113, %s129
    %p131 = scmp.eq.s32.totalorder %s16, 0
    %p132 = por %p130, %p131
    %p133 = scmp.le.s32.totalorder 1, %s10
    %p134 = scmp.lt.s32.totalorder %s10, 4
    %p135 = pnand %p133, %p134
    %p136 = pneg %p135
    // Predicated region
    $region9: #{_lambda_.4} parent=5 // pred_check
      _
    $region10: #{_lambda_.4} parent=5 // pred_check_branch
      %138 = sbr.rel (%p135) target = $region12
    $region11: #{_lambda_.4} parent=5 // pred_region
      %s139 = ssub.s32 %s10, 1
      // Predicated region
      $region13: #{_lambda_.4} parent=11 // pred_check
        %p140 = pneg %p57
      $region14: #{_lambda_.4} parent=11 // pred_check_branch
        %142 = sbr.rel (%p140) target = $region16
      $region15: #{_lambda_.4} parent=11 // pred_region
        _
      $region16: #{_lambda_.4} parent=11 // pred_fallthru
        _
      // Predicated region
      $region17: #{_lambda_.4} parent=11 // pred_check
        %p143 = pneg %p78
      $region18: #{_lambda_.4} parent=11 // pred_check_branch
        %145 = sbr.rel (%p143) target = $region20
      $region19: #{_lambda_.4} parent=11 // pred_region
        _
      $region20: #{_lambda_.4} parent=11 // pred_fallthru
        _
      // Predicated region
      $region21: #{_lambda_.4} parent=11 // pred_check
        %p146 = pneg %p99
      $region22: #{_lambda_.4} parent=11 // pred_check_branch
        %148 = sbr.rel (%p146) target = $region24
      $region23: #{_lambda_.4} parent=11 // pred_region
        _
      $region24: #{_lambda_.4} parent=11 // pred_fallthru
        _
    $region12: #{_lambda_.4} parent=5 // pred_fallthru
      _
    %p149 = scmp.lt.s32.totalorder %s10, 3
    // Predicated region
    $region25: #{_lambda_.4} parent=5 // pred_check
      %p150 = pneg %p149
    $region26: #{_lambda_.4} parent=5 // pred_check_branch
      %152 = sbr.rel (%p150) target = $region28
    $region27: #{_lambda_.4} parent=5 // pred_region
      // Predicated region
      $region29: #{_lambda_.4} parent=27 // pred_check
        %p153 = pneg %p30
      $region30: #{_lambda_.4} parent=27 // pred_check_branch
        %155 = sbr.rel (%p153) target = $region32
      $region31: #{_lambda_.4} parent=27 // pred_region
        %s156 = smul.u32 16, %s10
        %p157 = scmp.lt.s32.totalorder %s156, 47
        %s158 = scalar_select %p157, %s156, 47
        %s159 = smul.addr %s158, 4
        %s160 = scalar_lea.vmem %s0, %s159
        %s161 = smul.u32 16, %s10
      $region32: #{_lambda_.4} parent=27 // pred_fallthru
        _
    $region28: #{_lambda_.4} parent=5 // pred_fallthru
      _
    %p162 = scmp.le.s32.totalorder 1, %s10
    %p163 = scmp.lt.s32.totalorder %s10, 4
    %p164 = pnand %p162, %p163
    %p165 = pneg %p164
    // Predicated region
    $region33: #{_lambda_.4} parent=5 // pred_check
      _
    $region34: #{_lambda_.4} parent=5 // pred_check_branch
      %167 = sbr.rel (%p164) target = $region36
    $region35: #{_lambda_.4} parent=5 // pred_region
      %s168 = ssub.s32 %s10, 1
      %s169 = smul.u32 16, %s15
      %p170 = scmp.lt.s32.totalorder %s169, 47
      %s171 = scalar_select %p170, %s169, 47
      %s172 = smul.addr %s171, 4
      %s173 = scalar_lea.vmem %s0, %s172
      %p174 = pneg %p36
      %p175 = pneg %p33
      %p176 = pneg %p57
      %p177 = pneg %p54
      %p178 = pneg %p78
      %p179 = pneg %p75
      %p180 = pneg %p99
      %p181 = pneg %p96
      %p182 = pneg %p125
      %p183 = pneg %p122
      %s184 = smul.u32 16, %s15
      %p185 = scmp.lt.s32.totalorder %s184, 47
      %s186 = scalar_select %p185, %s184, 47
      %s187 = smul.addr %s186, 4
      %s188 = scalar_lea.vmem %s4, %s187
      %s189 = smul.u32 16, %s15
      %p190 = scmp.lt.s32.totalorder %s189, 47
      %s191 = scalar_select %p190, %s189, 47
      %s192 = smul.addr %s191, 4
      %s193 = scalar_lea.vmem %s0, %s192
      %s194 = smul.u32 16, %s15
      %s195 = smul.u32 16, %s15
      %p196 = scmp.lt.s32.totalorder %s195, 47
      %s197 = scalar_select %p196, %s195, 47
      %s198 = smul.addr %s197, 4
      %s199 = scalar_lea.vmem %s4, %s198
      %s200 = smul.u32 16, %s15
      %v201 = vld [vmem:[%s193] sm:$0xf]
      %v202 = vld [vmem:[%s193 + $0x4] sm:$0xf]
      %v203 = vld [vmem:[%s193 + $0x8] sm:$0xf]
      %v204 = vld [vmem:[%s193 + $0xc] sm:$0xf]
      %v205 = vld [vmem:[%s193 + $0x10] sm:$0xf]
      %v206 = vld [vmem:[%s193 + $0x14] sm:$0xf]
      %v207 = vld [vmem:[%s193 + $0x18] sm:$0xf]
      %v208 = vld [vmem:[%s193 + $0x1c] sm:$0xf]
      %v209 = vld [vmem:[%s193 + $0x20] sm:$0xf]
      %v210 = vld [vmem:[%s193 + $0x24] sm:$0xf]
      %v211 = vld [vmem:[%s193 + $0x28] sm:$0xf]
      %v212 = vld [vmem:[%s193 + $0x2c] sm:$0xf]
      %v213 = vld [vmem:[%s193 + $0x30] sm:$0xf]
      %v214 = vld [vmem:[%s193 + $0x34] sm:$0xf]
      %v215 = vld [vmem:[%s193 + $0x38] sm:$0xf]
      %v216 = vld [vmem:[%s193 + $0x3c] sm:$0xf]
      %v217 = vld [vmem:[%s1] sm:$0xf]
      %v218 = vld [vmem:[%s1 + $0x4] sm:$0xf]
      %v219 = vld [vmem:[%s1 + $0x8] sm:$0xf]
      %v220 = vld [vmem:[%s1 + $0xc] sm:$0xf]
      %v221 = vld [vmem:[%s1 + $0x10] sm:$0xf]
      %v222 = vld [vmem:[%s1 + $0x14] sm:$0xf]
      %v223 = vld [vmem:[%s1 + $0x18] sm:$0xf]
      %v224 = vld [vmem:[%s1 + $0x1c] sm:$0xf]
      %v225 = vld [vmem:[%s1 + $0x20] sm:$0xf]
      %v226 = vld [vmem:[%s1 + $0x24] sm:$0xf]
      %v227 = vld [vmem:[%s1 + $0x28] sm:$0xf]
      %v228 = vld [vmem:[%s1 + $0x2c] sm:$0xf]
      %v229 = vld [vmem:[%s1 + $0x30] sm:$0xf]
      %v230 = vld [vmem:[%s1 + $0x34] sm:$0xf]
      %v231 = vld [vmem:[%s1 + $0x38] sm:$0xf]
      %v232 = vld [vmem:[%s1 + $0x3c] sm:$0xf]
      %v233 = vld [vmem:[%s2] sm:$0x1]
      %v235 = vperm.slane %v233, 0
      %v253 = vunpack.c.l.b16 %v201
      %v254 = vunpack.c.l.b16 %v202
      %v255 = vunpack.c.l.b16 %v203
      %v256 = vunpack.c.l.b16 %v204
      %v257 = vunpack.c.l.b16 %v205
      %v258 = vunpack.c.l.b16 %v206
      %v259 = vunpack.c.l.b16 %v207
      %v260 = vunpack.c.l.b16 %v208
      %v261 = vunpack.c.l.b16 %v209
      %v262 = vunpack.c.l.b16 %v210
      %v263 = vunpack.c.l.b16 %v211
      %v264 = vunpack.c.l.b16 %v212
      %v265 = vunpack.c.l.b16 %v213
      %v266 = vunpack.c.l.b16 %v214
      %v267 = vunpack.c.l.b16 %v215
      %v268 = vunpack.c.l.b16 %v216
      %v269 = vpack.c.b16 %v254, %v253
      %v270 = vpack.c.b16 %v256, %v255
      %v271 = vpack.c.b16 %v258, %v257
      %v272 = vpack.c.b16 %v260, %v259
      %v273 = vpack.c.b16 %v262, %v261
      %v274 = vpack.c.b16 %v264, %v263
      %v275 = vpack.c.b16 %v266, %v265
      %v276 = vpack.c.b16 %v268, %v267
      %v301 = vunpack.c.l.b16 %v217
      %v302 = vunpack.c.l.b16 %v218
      %v303 = vunpack.c.l.b16 %v219
      %v304 = vunpack.c.l.b16 %v220
      %v305 = vunpack.c.l.b16 %v221
      %v306 = vunpack.c.l.b16 %v222
      %v307 = vunpack.c.l.b16 %v223
      %v308 = vunpack.c.l.b16 %v224
      %v309 = vunpack.c.l.b16 %v225
      %v310 = vunpack.c.l.b16 %v226
      %v311 = vunpack.c.l.b16 %v227
      %v312 = vunpack.c.l.b16 %v228
      %v313 = vunpack.c.l.b16 %v229
      %v314 = vunpack.c.l.b16 %v230
      %v315 = vunpack.c.l.b16 %v231
      %v316 = vunpack.c.l.b16 %v232
      %v317 = vpack.c.b16 %v302, %v301
      %v318 = vpack.c.b16 %v304, %v303
      %v319 = vpack.c.b16 %v306, %v305
      %v320 = vpack.c.b16 %v308, %v307
      %v321 = vpack.c.b16 %v310, %v309
      %v322 = vpack.c.b16 %v312, %v311
      %v323 = vpack.c.b16 %v314, %v313
      %v324 = vpack.c.b16 %v316, %v315
      %333 = vmatpush.bf16.msra.mxu0 %v324
      %334 = vmatpush.bf16.msra.mxu0 %v323
      %335 = vmatpush.bf16.msra.mxu0 %v322
      %336 = vmatpush.bf16.msra.mxu0 %v321
      %337 = vmatpush.bf16.msra.mxu0 %v320
      %338 = vmatpush.bf16.msra.mxu0 %v319
      %339 = vmatpush.bf16.msra.mxu0 %v318
      %340 = vmatpush.bf16.msra.mxu0 %v317
      %341 = vmatmul.bf16.gmra.mxu0 %v269
      %v342 = vpop.f32.mrf.mxu0
      %v343 = vadd.f32 %v235, %v342
      %v344 = vpop.f32.mrf.mxu0
      %v345 = vadd.f32 %v235, %v344
      %346 = vmatmul.bf16.gmra.mxu0 %v270
      %v347 = vpop.f32.mrf.mxu0
      %v348 = vadd.f32 %v235, %v347
      %v349 = vpop.f32.mrf.mxu0
      %v350 = vadd.f32 %v235, %v349
      %351 = vmatmul.bf16.gmra.mxu0 %v271
      %v352 = vpop.f32.mrf.mxu0
      %v353 = vadd.f32 %v235, %v352
      %v354 = vpop.f32.mrf.mxu0
      %v355 = vadd.f32 %v235, %v354
      %356 = vmatmul.bf16.gmra.mxu0 %v272
      %v357 = vpop.f32.mrf.mxu0
      %v358 = vadd.f32 %v235, %v357
      %v359 = vpop.f32.mrf.mxu0
      %v360 = vadd.f32 %v235, %v359
      %361 = vmatmul.bf16.gmra.mxu0 %v273
      %v362 = vpop.f32.mrf.mxu0
      %v363 = vadd.f32 %v235, %v362
      %v364 = vpop.f32.mrf.mxu0
      %v365 = vadd.f32 %v235, %v364
      %366 = vmatmul.bf16.gmra.mxu0 %v274
      %v367 = vpop.f32.mrf.mxu0
      %v368 = vadd.f32 %v235, %v367
      %v369 = vpop.f32.mrf.mxu0
      %v370 = vadd.f32 %v235, %v369
      %371 = vmatmul.bf16.gmra.mxu0 %v275
      %v372 = vpop.f32.mrf.mxu0
      %v373 = vadd.f32 %v235, %v372
      %v374 = vpop.f32.mrf.mxu0
      %v375 = vadd.f32 %v235, %v374
      %376 = vmatmul.bf16.gmra.mxu0 %v276
      %v377 = vpop.f32.mrf.mxu0
      %v378 = vadd.f32 %v235, %v377
      %v379 = vpop.f32.mrf.mxu0
      %v380 = vadd.f32 %v235, %v379
      %381 = vdwg.mxu0
      %v382 = vpack.c.bf16 %v345, %v343
      %v383 = vpack.c.bf16 %v350, %v348
      %v384 = vpack.c.bf16 %v355, %v353
      %v385 = vpack.c.bf16 %v360, %v358
      %v386 = vpack.c.bf16 %v365, %v363
      %v387 = vpack.c.bf16 %v370, %v368
      %v388 = vpack.c.bf16 %v375, %v373
      %v389 = vpack.c.bf16 %v380, %v378
      %v390 = vld [vmem:[%s3] sm:$0xf]
      %v391 = vld [vmem:[%s3 + $0x4] sm:$0xf]
      %v392 = vld [vmem:[%s3 + $0x8] sm:$0xf]
      %v393 = vld [vmem:[%s3 + $0xc] sm:$0xf]
      %v394 = vld [vmem:[%s3 + $0x10] sm:$0xf]
      %v395 = vld [vmem:[%s3 + $0x14] sm:$0xf]
      %v396 = vld [vmem:[%s3 + $0x18] sm:$0xf]
      %v397 = vld [vmem:[%s3 + $0x1c] sm:$0xf]
      %v398 = vld [vmem:[%s3 + $0x20] sm:$0xf]
      %v399 = vld [vmem:[%s3 + $0x24] sm:$0xf]
      %v400 = vld [vmem:[%s3 + $0x28] sm:$0xf]
      %v401 = vld [vmem:[%s3 + $0x2c] sm:$0xf]
      %v402 = vld [vmem:[%s3 + $0x30] sm:$0xf]
      %v403 = vld [vmem:[%s3 + $0x34] sm:$0xf]
      %v404 = vld [vmem:[%s3 + $0x38] sm:$0xf]
      %v405 = vld [vmem:[%s3 + $0x3c] sm:$0xf]
      %v422 = vunpack.c.l.b16 %v390
      %v423 = vunpack.c.l.b16 %v391
      %v424 = vunpack.c.l.b16 %v392
      %v425 = vunpack.c.l.b16 %v393
      %v426 = vunpack.c.l.b16 %v394
      %v427 = vunpack.c.l.b16 %v395
      %v428 = vunpack.c.l.b16 %v396
      %v429 = vunpack.c.l.b16 %v397
      %v430 = vunpack.c.l.b16 %v398
      %v431 = vunpack.c.l.b16 %v399
      %v432 = vunpack.c.l.b16 %v400
      %v433 = vunpack.c.l.b16 %v401
      %v434 = vunpack.c.l.b16 %v402
      %v435 = vunpack.c.l.b16 %v403
      %v436 = vunpack.c.l.b16 %v404
      %v437 = vunpack.c.l.b16 %v405
      %v438 = vpack.c.b16 %v423, %v422
      %v439 = vpack.c.b16 %v425, %v424
      %v440 = vpack.c.b16 %v427, %v426
      %v441 = vpack.c.b16 %v429, %v428
      %v442 = vpack.c.b16 %v431, %v430
      %v443 = vpack.c.b16 %v433, %v432
      %v444 = vpack.c.b16 %v435, %v434
      %v445 = vpack.c.b16 %v437, %v436
      %454 = vmatpush.bf16.msra.mxu0 %v445
      %455 = vmatpush.bf16.msra.mxu0 %v444
      %456 = vmatpush.bf16.msra.mxu0 %v443
      %457 = vmatpush.bf16.msra.mxu0 %v442
      %458 = vmatpush.bf16.msra.mxu0 %v441
      %459 = vmatpush.bf16.msra.mxu0 %v440
      %460 = vmatpush.bf16.msra.mxu0 %v439
      %461 = vmatpush.bf16.msra.mxu0 %v438
      %462 = vmatmul.bf16.gmra.mxu0 %v382
      %v463 = vpop.f32.mrf.mxu0
      %v464 = vadd.f32 0.0, %v463
      %v465 = vpop.f32.mrf.mxu0
      %v466 = vadd.f32 0.0, %v465
      %467 = vmatmul.bf16.gmra.mxu0 %v383
      %v468 = vpop.f32.mrf.mxu0
      %v469 = vadd.f32 0.0, %v468
      %v470 = vpop.f32.mrf.mxu0
      %v471 = vadd.f32 0.0, %v470
      %472 = vmatmul.bf16.gmra.mxu0 %v384
      %v473 = vpop.f32.mrf.mxu0
      %v474 = vadd.f32 0.0, %v473
      %v475 = vpop.f32.mrf.mxu0
      %v476 = vadd.f32 0.0, %v475
      %477 = vmatmul.bf16.gmra.mxu0 %v385
      %v478 = vpop.f32.mrf.mxu0
      %v479 = vadd.f32 0.0, %v478
      %v480 = vpop.f32.mrf.mxu0
      %v481 = vadd.f32 0.0, %v480
      %482 = vmatmul.bf16.gmra.mxu0 %v386
      %v483 = vpop.f32.mrf.mxu0
      %v484 = vadd.f32 0.0, %v483
      %v485 = vpop.f32.mrf.mxu0
      %v486 = vadd.f32 0.0, %v485
      %487 = vmatmul.bf16.gmra.mxu0 %v387
      %v488 = vpop.f32.mrf.mxu0
      %v489 = vadd.f32 0.0, %v488
      %v490 = vpop.f32.mrf.mxu0
      %v491 = vadd.f32 0.0, %v490
      %492 = vmatmul.bf16.gmra.mxu0 %v388
      %v493 = vpop.f32.mrf.mxu0
      %v494 = vadd.f32 0.0, %v493
      %v495 = vpop.f32.mrf.mxu0
      %v496 = vadd.f32 0.0, %v495
      %497 = vmatmul.bf16.gmra.mxu0 %v389
      %v498 = vpop.f32.mrf.mxu0
      %v499 = vadd.f32 0.0, %v498
      %v500 = vpop.f32.mrf.mxu0
      %v501 = vadd.f32 0.0, %v500
      %502 = vdwg.mxu0
      %v503 = vpack.c.bf16 %v464, %v464
      %v504 = vpack.c.bf16 %v466, %v466
      %v505 = vpack.c.bf16 %v469, %v469
      %v506 = vpack.c.bf16 %v471, %v471
      %v507 = vpack.c.bf16 %v474, %v474
      %v508 = vpack.c.bf16 %v476, %v476
      %v509 = vpack.c.bf16 %v479, %v479
      %v510 = vpack.c.bf16 %v481, %v481
      %v511 = vpack.c.bf16 %v484, %v484
      %v512 = vpack.c.bf16 %v486, %v486
      %v513 = vpack.c.bf16 %v489, %v489
      %v514 = vpack.c.bf16 %v491, %v491
      %v515 = vpack.c.bf16 %v494, %v494
      %v516 = vpack.c.bf16 %v496, %v496
      %v517 = vpack.c.bf16 %v499, %v499
      %v518 = vpack.c.bf16 %v501, %v501
      %519 = vst [vmem:[%s199] sm:$0xf] %v503
      %520 = vst [vmem:[%s199 + $0x4] sm:$0xf] %v504
      %521 = vst [vmem:[%s199 + $0x8] sm:$0xf] %v505
      %522 = vst [vmem:[%s199 + $0xc] sm:$0xf] %v506
      %523 = vst [vmem:[%s199 + $0x10] sm:$0xf] %v507
      %524 = vst [vmem:[%s199 + $0x14] sm:$0xf] %v508
      %525 = vst [vmem:[%s199 + $0x18] sm:$0xf] %v509
      %526 = vst [vmem:[%s199 + $0x1c] sm:$0xf] %v510
      %527 = vst [vmem:[%s199 + $0x20] sm:$0xf] %v511
      %528 = vst [vmem:[%s199 + $0x24] sm:$0xf] %v512
      %529 = vst [vmem:[%s199 + $0x28] sm:$0xf] %v513
      %530 = vst [vmem:[%s199 + $0x2c] sm:$0xf] %v514
      %531 = vst [vmem:[%s199 + $0x30] sm:$0xf] %v515
      %532 = vst [vmem:[%s199 + $0x34] sm:$0xf] %v516
      %533 = vst [vmem:[%s199 + $0x38] sm:$0xf] %v517
      %534 = vst [vmem:[%s199 + $0x3c] sm:$0xf] %v518
      %s535 = smul.u32 16, %s15
      %p536 = scmp.lt.s32.totalorder %s535, 47
      %s537 = scalar_select %p536, %s535, 47
      %s538 = smul.addr %s537, 4
      %s539 = scalar_lea.vmem %s4, %s538
      // Predicated region
      $region37: #{_lambda_.4} parent=35 // pred_check
        %p540 = pneg %p122
      $region38: #{_lambda_.4} parent=35 // pred_check_branch
        %542 = sbr.rel (%p540) target = $region40
      $region39: #{_lambda_.4} parent=35 // pred_region
        %s543 = smul.u32 16, %s15
      $region40: #{_lambda_.4} parent=35 // pred_fallthru
        _
    $region36: #{_lambda_.4} parent=5 // pred_fallthru
      _
    %p544 = scmp.le.s32.totalorder 2, %s10
    // Predicated region
    $region41: #{_lambda_.4} parent=5 // pred_check
      %p545 = pneg %p544
    $region42: #{_lambda_.4} parent=5 // pred_check_branch
      %547 = sbr.rel (%p545) target = $region44
    $region43: #{_lambda_.4} parent=5 // pred_region
      %s548 = ssub.s32 %s10, 2
      // Predicated region
      $region45: #{_lambda_.4} parent=43 // pred_check
        %p549 = pneg %p128
      $region46: #{_lambda_.4} parent=43 // pred_check_branch
        %551 = sbr.rel (%p549) target = $region48
      $region47: #{_lambda_.4} parent=43 // pred_region
        %s552 = smul.u32 16, %s16
        %p553 = scmp.lt.s32.totalorder %s552, 47
        %s554 = scalar_select %p553, %s552, 47
        %s555 = smul.addr %s554, 4
        %s556 = scalar_lea.vmem %s4, %s555
      $region48: #{_lambda_.4} parent=43 // pred_fallthru
        _
    $region44: #{_lambda_.4} parent=5 // pred_fallthru
      _
  $region6: #{_lambda_.4} parent=0 // loop_footer
    %s14 = sadd.s32 1, %s10
  $region7: #{_lambda_.4} parent=0 // loop_footer_branch
    %9 = sbr.rel target = $region3
  $region8: #{_lambda_.4} parent=0 // loop_exit
    _

// kernel: _lambda_.5
$region0: #{_lambda_.5}
  #allocation0 [shape = 'u32[]', space=smem, size = 0x4, offset = 0x4, fixed_abs, tag = 'smem constant byte address 0x4 - core index']
  #allocation1 [shape = 'u32[72,128]{1,0:T(1,128)}', space=vmem, size = 0x9000, scoped, tag = 'internal scratch']
  #allocation2 [shape = 'f32[128,128]{1,0:T(8,128)}', space=vmem, size = 0x10000, scoped, tag = 'scratch operand']
  #allocation3 [shape = 's32[1]{0}', space=sflag, size = 0x4, scoped, tag = 'scoped memory for _lambda_.5']
  #allocation4 [shape = 'u8[512]{0}', space=smem, size = 0x200, scoped, tag = 'prefetched SMEM operand 0']
  #allocation5 [shape = 'u8[512]{0}', space=smem, size = 0x200, scoped, tag = 'prefetched SMEM operand 1']
  %s0 = inlined_call_operand.vmem [shape: s32[3], index: 0, kind: input, shape index: {}]
  %s1 = inlined_call_operand.vmem [shape: s32[9], index: 1, kind: input, shape index: {}]
  %s2 = inlined_call_operand.vmem [shape: bf16[384,384], index: 2, kind: input, shape index: {}]
  %s3 = inlined_call_operand.vmem [shape: bf16[384,128], index: 3, kind: input, shape index: {}]
  %s4 = inlined_call_operand.vmem [shape: f32[1,128], index: 4, kind: input, shape index: {}]
  %s5 = inlined_call_operand.vmem [shape: bf16[128,128], index: 5, kind: input, shape index: {}]
  %s6 = inlined_call_operand.vmem [shape: bf16[384,128], index: 6, kind: output, shape index: {}]
  %s7 = sld [smem:[#allocation0]]
  $region102: #{_lambda_.5} parent=0
    _
  %s9 = ssub.s32 1, %s7
  %s10 = scalar_select 0, %s9, %s7
  %s12 = sshll.u32 %s0, 4
  %s13 = int_to_ptr.vmem [resolvable:$true] %s12
  %15 = dma.vmem_to_smem %s13, 16, [#allocation4], [#allocation3]
  %s17 = sshll.u32 %s1, 4
  %s18 = int_to_ptr.vmem [resolvable:$true] %s17
  %20 = dma.vmem_to_smem %s18, 16, [#allocation5], [#allocation3]
  %22 = dma.done [#allocation3], 32
  %23 = sfence
  $region1: #{_lambda_.5} parent=0
    #allocation6 [shape = 'u8[65536]{0}', space=vmem, size = 0x10000, scoped, tag = 'input window, operand 2']
    loop: start=0, step=1, limit=11
    $region2: #{_lambda_.5} parent=1 // loop_pre_header
      _
    $region3: #{_lambda_.5} parent=1 // loop_header
      %s25 = sphi 0, %s29
      %p26 = scmp.ge.s32.totalorder %s25, 11
      %s32 = sphi 0, %s44
      %s33 = sphi 0, %s40
      %s34 = sphi 0, %s32
      %s35 = sphi 0, %s33
      %s36 = sphi 0, %s34
      %s37 = sphi 0, %s35
      %s55 = sphi 0, %s57
      %s58 = sphi 0, %s55
      %s59 = sphi 0, %s58
      %s75 = sphi 0, %s59
      %s79 = sphi 0, %s79
      %s81 = sphi 0, %s79
      %s82 = sphi 0, %s81
      %s96 = sphi 0, %s82
      %s100 = sphi 0, %s100
      %s102 = sphi 0, %s100
      %s103 = sphi 0, %s102
      %s117 = sphi 0, %s103
      %s121 = sphi 0, %s121
      %s123 = sphi 0, %s121
      %s124 = sphi 0, %s123
      %s138 = sphi 0, %s124
      %s144 = sphi 0, %s146
      %s147 = sphi 0, %s144
      %s148 = sphi 0, %s147
      %s164 = sphi 0, %s148
    $region4: #{_lambda_.5} parent=1 // loop_header_branch
      %28 = sbr.rel (%p26) target = $region8
    $region5: #{_lambda_.5} parent=1 // loop_body
      %s30 = ssub.s32 %s25, 1
      %s31 = ssub.s32 %s25, 2
      %s38 = sadd.s32 1, %s33
      %p39 = scmp.ge.s32.totalorder %s38, 3
      %s40 = scalar_select %p39, 0, %s38
      %s41 = sadd.s32 1, %s32
      %s42 = scalar_select %p39, %s41, %s32
      %p43 = scmp.ge.s32.totalorder %s42, 3
      %s44 = scalar_select %p43, 0, %s42
      %s45 = smul.u32 %s32, 3
      %s46 = sadd.s32 %s45, %s33
      %s47 = sld [smem:[#allocation5 + %s46]]
      %s48 = smul.u32 %s44, 3
      %s49 = sadd.s32 %s48, %s40
      %s50 = sld [smem:[#allocation5 + %s49]]
      %s51 = ssub.s32 %s32, %s44
      %s52 = ssub.s32 %s47, %s50
      %s53 = sor.u32 %s51, %s52
      %p54 = scmp.eq.s32.totalorder %s53, 0
      %s56 = sadd.s32 %s55, 1
      %s57 = scalar_select %p54, %s55, %s56
      %p60 = pneg %p54
      %p61 = scmp.eq.s32.totalorder %s25, 8
      %p62 = por %p60, %p61
      %p63 = scmp.ne.s32.totalorder %s55, %s58
      %p64 = scmp.eq.s32.totalorder %s25, 0
      %p65 = por %p63, %p64
      %p66 = scmp.ne.s32.totalorder %s55, %s58
      %p67 = scmp.eq.s32.totalorder %s30, 8
      %p68 = por %p66, %p67
      %p69 = scmp.ne.s32.totalorder %s58, %s59
      %p70 = scmp.eq.s32.totalorder %s30, 0
      %p71 = por %p69, %p70
      %p72 = scmp.ne.s32.totalorder %s58, %s59
      %p73 = scmp.eq.s32.totalorder %s31, 8
      %p74 = por %p72, %p73
      %p76 = scmp.ne.s32.totalorder %s59, %s75
      %p77 = scmp.eq.s32.totalorder %s31, 0
      %p78 = por %p76, %p77
      %s80 = sadd.s32 %s79, 1
      %p83 = scmp.eq.s32.totalorder %s25, 8
      %p84 = scmp.ne.s32.totalorder %s79, %s81
      %p85 = scmp.eq.s32.totalorder %s25, 0
      %p86 = por %p84, %p85
      %p87 = scmp.ne.s32.totalorder %s79, %s81
      %p88 = scmp.eq.s32.totalorder %s30, 8
      %p89 = por %p87, %p88
      %p90 = scmp.ne.s32.totalorder %s81, %s82
      %p91 = scmp.eq.s32.totalorder %s30, 0
      %p92 = por %p90, %p91
      %p93 = scmp.ne.s32.totalorder %s81, %s82
      %p94 = scmp.eq.s32.totalorder %s31, 8
      %p95 = por %p93, %p94
      %p97 = scmp.ne.s32.totalorder %s82, %s96
      %p98 = scmp.eq.s32.totalorder %s31, 0
      %p99 = por %p97, %p98
      %s101 = sadd.s32 %s100, 1
      %p104 = scmp.eq.s32.totalorder %s25, 8
      %p105 = scmp.ne.s32.totalorder %s100, %s102
      %p106 = scmp.eq.s32.totalorder %s25, 0
      %p107 = por %p105, %p106
      %p108 = scmp.ne.s32.totalorder %s100, %s102
      %p109 = scmp.eq.s32.totalorder %s30, 8
      %p110 = por %p108, %p109
      %p111 = scmp.ne.s32.totalorder %s102, %s103
      %p112 = scmp.eq.s32.totalorder %s30, 0
      %p113 = por %p111, %p112
      %p114 = scmp.ne.s32.totalorder %s102, %s103
      %p115 = scmp.eq.s32.totalorder %s31, 8
      %p116 = por %p114, %p115
      %p118 = scmp.ne.s32.totalorder %s103, %s117
      %p119 = scmp.eq.s32.totalorder %s31, 0
      %p120 = por %p118, %p119
      %s122 = sadd.s32 %s121, 1
      %p125 = scmp.eq.s32.totalorder %s25, 8
      %p126 = scmp.ne.s32.totalorder %s121, %s123
      %p127 = scmp.eq.s32.totalorder %s25, 0
      %p128 = por %p126, %p127
      %p129 = scmp.ne.s32.totalorder %s121, %s123
      %p130 = scmp.eq.s32.totalorder %s30, 8
      %p131 = por %p129, %p130
      %p132 = scmp.ne.s32.totalorder %s123, %s124
      %p133 = scmp.eq.s32.totalorder %s30, 0
      %p134 = por %p132, %p133
      %p135 = scmp.ne.s32.totalorder %s123, %s124
      %p136 = scmp.eq.s32.totalorder %s31, 8
      %p137 = por %p135, %p136
      %p139 = scmp.ne.s32.totalorder %s124, %s138
      %p140 = scmp.eq.s32.totalorder %s31, 0
      %p141 = por %p139, %p140
      %s142 = ssub.s32 %s32, %s44
      %p143 = scmp.eq.s32.totalorder %s142, 0
      %s145 = sadd.s32 %s144, 1
      %s146 = scalar_select %p143, %s144, %s145
      %p149 = pneg %p143
      %p150 = scmp.eq.s32.totalorder %s25, 8
      %p151 = por %p149, %p150
      %p152 = scmp.ne.s32.totalorder %s144, %s147
      %p153 = scmp.eq.s32.totalorder %s25, 0
      %p154 = por %p152, %p153
      %p155 = scmp.ne.s32.totalorder %s144, %s147
      %p156 = scmp.eq.s32.totalorder %s30, 8
      %p157 = por %p155, %p156
      %p158 = scmp.ne.s32.totalorder %s147, %s148
      %p159 = scmp.eq.s32.totalorder %s30, 0
      %p160 = por %p158, %p159
      %p161 = scmp.ne.s32.totalorder %s147, %s148
      %p162 = scmp.eq.s32.totalorder %s31, 8
      %p163 = por %p161, %p162
      %p165 = scmp.ne.s32.totalorder %s148, %s164
      %p166 = scmp.eq.s32.totalorder %s31, 0
      %p167 = por %p165, %p166
      %p168 = scmp.le.s32.totalorder 1, %s25
      %p169 = scmp.lt.s32.totalorder %s25, 10
      %p170 = pnand %p168, %p169
      %p171 = pneg %p170
      // Predicated region
      $region9: #{_lambda_.5} parent=5 // pred_check
        _
      $region10: #{_lambda_.5} parent=5 // pred_check_branch
        %173 = sbr.rel (%p170) target = $region12
      $region11: #{_lambda_.5} parent=5 // pred_region
        %s174 = ssub.s32 %s25, 1
        // Predicated region
        $region13: #{_lambda_.5} parent=11 // pred_check
          %p175 = pneg %p92
        $region14: #{_lambda_.5} parent=11 // pred_check_branch
          %177 = sbr.rel (%p175) target = $region16
        $region15: #{_lambda_.5} parent=11 // pred_region
          _
        $region16: #{_lambda_.5} parent=11 // pred_fallthru
          _
        // Predicated region
        $region17: #{_lambda_.5} parent=11 // pred_check
          %p178 = pneg %p113
        $region18: #{_lambda_.5} parent=11 // pred_check_branch
          %180 = sbr.rel (%p178) target = $region20
        $region19: #{_lambda_.5} parent=11 // pred_region
          _
        $region20: #{_lambda_.5} parent=11 // pred_fallthru
          _
        // Predicated region
        $region21: #{_lambda_.5} parent=11 // pred_check
          %p181 = pneg %p134
        $region22: #{_lambda_.5} parent=11 // pred_check_branch
          %183 = sbr.rel (%p181) target = $region24
        $region23: #{_lambda_.5} parent=11 // pred_region
          _
        $region24: #{_lambda_.5} parent=11 // pred_fallthru
          _
      $region12: #{_lambda_.5} parent=5 // pred_fallthru
        _
      %p184 = scmp.lt.s32.totalorder %s25, 9
      // Predicated region
      $region25: #{_lambda_.5} parent=5 // pred_check
        %p185 = pneg %p184
      $region26: #{_lambda_.5} parent=5 // pred_check_branch
        %187 = sbr.rel (%p185) target = $region28
      $region27: #{_lambda_.5} parent=5 // pred_region
        // Predicated region
        $region29: #{_lambda_.5} parent=27 // pred_check
          %p188 = pneg %p65
        $region30: #{_lambda_.5} parent=27 // pred_check_branch
          %190 = sbr.rel (%p188) target = $region32
        $region31: #{_lambda_.5} parent=27 // pred_region
          %s191 = sand.u32 %s55, 1
          %s192 = sand.u32 %s55, 1
          %s193 = smul.addr %s192, 64
          %s194 = scalar_lea.vmem [#allocation6], %s193
          %s195 = smul.u32 %s32, 3
          %s196 = sadd.s32 %s195, %s33
          %s197 = sld [smem:[#allocation5 + %s196]]
          %s198 = smul.u32 16, %s32
          %s199 = smul.addr %s198, 3
          %s200 = sadd.s32 %s197, %s199
          %s201 = smul.addr %s200, 4
          %s202 = scalar_lea.vmem %s2, %s201
          // Predicated region
          $region33: #{_lambda_.5} parent=31 // pred_check
            _
          $region34: #{_lambda_.5} parent=31 // pred_check_branch
            %204 = sbr.rel (0) target = $region36
          $region35: #{_lambda_.5} parent=31 // pred_region
            // Predicated region
            $region37: #{_lambda_.5} parent=35 // pred_check
              _
            $region38: #{_lambda_.5} parent=35 // pred_check_branch
              %206 = sbr.rel target = $region40
            $region39: #{_lambda_.5} parent=35 // pred_region
              // Predicated region
              $region52: #{_lambda_.5} parent=39 // pred_check
                _
              $region53: #{_lambda_.5} parent=39 // pred_check_branch
                %252 = sbr.rel (0) target = $region55
              $region54: #{_lambda_.5} parent=39 // pred_region
                loop: start=0, step=1, limit=1
                $region56: #{_lambda_.5} parent=54 // loop_pre_header
                  _
                $region57: #{_lambda_.5} parent=54 // loop_header
                  %s254 = sphi 0, %s258
                  %p255 = scmp.ge.s32.totalorder %s254, 1
                  %s259 = sphi %s202, %s202
                  %s260 = sphi %s194, %s194
                $region58: #{_lambda_.5} parent=54 // loop_header_branch
                  %257 = sbr.rel (%p255) target = $region62
                $region59: #{_lambda_.5} parent=54 // loop_body
                  _
                $region60: #{_lambda_.5} parent=54 // loop_footer
                  %s258 = sadd.s32 1, %s254
                $region61: #{_lambda_.5} parent=54 // loop_footer_branch
                  %253 = sbr.rel target = $region57
                $region62: #{_lambda_.5} parent=54 // loop_exit
                  _
                %s262 = ssub.s32 16, 1
                loop: start=0, step=1, limit=1
                $region63: #{_lambda_.5} parent=54 // loop_pre_header
                  _
                $region64: #{_lambda_.5} parent=54 // loop_header
                  %s264 = sphi 0, %s268
                  %p265 = scmp.ge.s32.totalorder %s264, 1
                  %s269 = sphi %s202, %s202
                  %s270 = sphi %s194, %s194
                $region65: #{_lambda_.5} parent=54 // loop_header_branch
                  %267 = sbr.rel (%p265) target = $region69
                $region66: #{_lambda_.5} parent=54 // loop_body
                  %v271 = vld [vmem:[%s269] sm:%s262]
                  %272 = vst [vmem:[%s270] sm:%s262] %v271
                  %v273 = vld [vmem:[%s269 + $0xc] sm:%s262]
                  %274 = vst [vmem:[%s270 + $0x4] sm:%s262] %v273
                  %v275 = vld [vmem:[%s269 + $0x18] sm:%s262]
                  %276 = vst [vmem:[%s270 + $0x8] sm:%s262] %v275
                  %v277 = vld [vmem:[%s269 + $0x24] sm:%s262]
                  %278 = vst [vmem:[%s270 + $0xc] sm:%s262] %v277
                  %v279 = vld [vmem:[%s269 + $0x30] sm:%s262]
                  %280 = vst [vmem:[%s270 + $0x10] sm:%s262] %v279
                  %v281 = vld [vmem:[%s269 + $0x3c] sm:%s262]
                  %282 = vst [vmem:[%s270 + $0x14] sm:%s262] %v281
                  %v283 = vld [vmem:[%s269 + $0x48] sm:%s262]
                  %284 = vst [vmem:[%s270 + $0x18] sm:%s262] %v283
                  %v285 = vld [vmem:[%s269 + $0x54] sm:%s262]
                  %286 = vst [vmem:[%s270 + $0x1c] sm:%s262] %v285
                  %v287 = vld [vmem:[%s269 + $0x60] sm:%s262]
                  %288 = vst [vmem:[%s270 + $0x20] sm:%s262] %v287
                  %v289 = vld [vmem:[%s269 + $0x6c] sm:%s262]
                  %290 = vst [vmem:[%s270 + $0x24] sm:%s262] %v289
                  %v291 = vld [vmem:[%s269 + $0x78] sm:%s262]
                  %292 = vst [vmem:[%s270 + $0x28] sm:%s262] %v291
                  %v293 = vld [vmem:[%s269 + $0x84] sm:%s262]
                  %294 = vst [vmem:[%s270 + $0x2c] sm:%s262] %v293
                  %v295 = vld [vmem:[%s269 + $0x90] sm:%s262]
                  %296 = vst [vmem:[%s270 + $0x30] sm:%s262] %v295
                  %v297 = vld [vmem:[%s269 + $0x9c] sm:%s262]
                  %298 = vst [vmem:[%s270 + $0x34] sm:%s262] %v297
                  %v299 = vld [vmem:[%s269 + $0xa8] sm:%s262]
                  %300 = vst [vmem:[%s270 + $0x38] sm:%s262] %v299
                  %v301 = vld [vmem:[%s269 + $0xb4] sm:%s262]
                  %302 = vst [vmem:[%s270 + $0x3c] sm:%s262] %v301
                $region67: #{_lambda_.5} parent=54 // loop_footer
                  %s268 = sadd.s32 1, %s264
                $region68: #{_lambda_.5} parent=54 // loop_footer_branch
                  %263 = sbr.rel target = $region64
                $region69: #{_lambda_.5} parent=54 // loop_exit
                  _
              $region55: #{_lambda_.5} parent=39 // pred_fallthru
                _
            $region40: #{_lambda_.5} parent=35 // pred_fallthru
              _
            // Predicated region
            $region41: #{_lambda_.5} parent=35 // pred_check
              _
            $region42: #{_lambda_.5} parent=35 // pred_check_branch
              %208 = sbr.rel (0) target = $region44
            $region43: #{_lambda_.5} parent=35 // pred_region
              %s210 = ssub.s32 16, 1
              loop: start=0, step=1, limit=1
              $region45: #{_lambda_.5} parent=43 // loop_pre_header
                _
              $region46: #{_lambda_.5} parent=43 // loop_header
                %s212 = sphi 0, %s216
                %p213 = scmp.ge.s32.totalorder %s212, 1
                %s217 = sphi %s202, %s202
                %s218 = sphi %s194, %s194
              $region47: #{_lambda_.5} parent=43 // loop_header_branch
                %215 = sbr.rel (%p213) target = $region51
              $region48: #{_lambda_.5} parent=43 // loop_body
                %v219 = vld [vmem:[%s217] sm:%s210]
                %220 = vst [vmem:[%s218] sm:%s210] %v219
                %v221 = vld [vmem:[%s217 + $0xc] sm:%s210]
                %222 = vst [vmem:[%s218 + $0x4] sm:%s210] %v221
                %v223 = vld [vmem:[%s217 + $0x18] sm:%s210]
                %224 = vst [vmem:[%s218 + $0x8] sm:%s210] %v223
                %v225 = vld [vmem:[%s217 + $0x24] sm:%s210]
                %226 = vst [vmem:[%s218 + $0xc] sm:%s210] %v225
                %v227 = vld [vmem:[%s217 + $0x30] sm:%s210]
                %228 = vst [vmem:[%s218 + $0x10] sm:%s210] %v227
                %v229 = vld [vmem:[%s217 + $0x3c] sm:%s210]
                %230 = vst [vmem:[%s218 + $0x14] sm:%s210] %v229
                %v231 = vld [vmem:[%s217 + $0x48] sm:%s210]
                %232 = vst [vmem:[%s218 + $0x18] sm:%s210] %v231
                %v233 = vld [vmem:[%s217 + $0x54] sm:%s210]
                %234 = vst [vmem:[%s218 + $0x1c] sm:%s210] %v233
                %v235 = vld [vmem:[%s217 + $0x60] sm:%s210]
                %236 = vst [vmem:[%s218 + $0x20] sm:%s210] %v235
                %v237 = vld [vmem:[%s217 + $0x6c] sm:%s210]
                %238 = vst [vmem:[%s218 + $0x24] sm:%s210] %v237
                %v239 = vld [vmem:[%s217 + $0x78] sm:%s210]
                %240 = vst [vmem:[%s218 + $0x28] sm:%s210] %v239
                %v241 = vld [vmem:[%s217 + $0x84] sm:%s210]
                %242 = vst [vmem:[%s218 + $0x2c] sm:%s210] %v241
                %v243 = vld [vmem:[%s217 + $0x90] sm:%s210]
                %244 = vst [vmem:[%s218 + $0x30] sm:%s210] %v243
                %v245 = vld [vmem:[%s217 + $0x9c] sm:%s210]
                %246 = vst [vmem:[%s218 + $0x34] sm:%s210] %v245
                %v247 = vld [vmem:[%s217 + $0xa8] sm:%s210]
                %248 = vst [vmem:[%s218 + $0x38] sm:%s210] %v247
                %v249 = vld [vmem:[%s217 + $0xb4] sm:%s210]
                %250 = vst [vmem:[%s218 + $0x3c] sm:%s210] %v249
              $region49: #{_lambda_.5} parent=43 // loop_footer
                %s216 = sadd.s32 1, %s212
              $region50: #{_lambda_.5} parent=43 // loop_footer_branch
                %211 = sbr.rel target = $region46
              $region51: #{_lambda_.5} parent=43 // loop_exit
                _
            $region44: #{_lambda_.5} parent=35 // pred_fallthru
              _
          $region36: #{_lambda_.5} parent=31 // pred_fallthru
            _
          %303 = vnop
        $region32: #{_lambda_.5} parent=27 // pred_fallthru
          _
      $region28: #{_lambda_.5} parent=5 // pred_fallthru
        _
      %p304 = scmp.le.s32.totalorder 1, %s25
      %p305 = scmp.lt.s32.totalorder %s25, 10
      %p306 = pnand %p304, %p305
      %p307 = pneg %p306
      // Predicated region
      $region70: #{_lambda_.5} parent=5 // pred_check
        _
      $region71: #{_lambda_.5} parent=5 // pred_check_branch
        %309 = sbr.rel (%p306) target = $region73
      $region72: #{_lambda_.5} parent=5 // pred_region
        %s310 = ssub.s32 %s25, 1
        %s311 = sand.u32 %s58, 1
        %s312 = sand.u32 %s58, 1
        %s313 = smul.addr %s312, 64
        %s314 = scalar_lea.vmem [#allocation6], %s313
        // Predicated region
        $region74: #{_lambda_.5} parent=72 // pred_check
          %p315 = pneg %p71
        $region75: #{_lambda_.5} parent=72 // pred_check_branch
          %317 = sbr.rel (%p315) target = $region77
        $region76: #{_lambda_.5} parent=72 // pred_region
          _
        $region77: #{_lambda_.5} parent=72 // pred_fallthru
          _
        %s318 = sand.u32 %s58, 1
        %s319 = sand.u32 %s58, 1
        %s320 = smul.addr %s319, 64
        %s321 = scalar_lea.vmem [#allocation6], %s320
        %p322 = pneg %p71
        %p323 = pneg %p68
        %p324 = pneg %p92
        %p325 = pneg %p89
        %p326 = pneg %p113
        %p327 = pneg %p110
        %p328 = pneg %p134
        %p329 = pneg %p131
        %p330 = pneg %p160
        %p331 = pneg %p157
        %s332 = smul.u32 16, %s34
        %p333 = scmp.lt.s32.totalorder %s332, 47
        %s334 = scalar_select %p333, %s332, 47
        %s335 = smul.addr %s334, 4
        %s336 = scalar_lea.vmem %s6, %s335
        %s337 = smul.u32 %s34, 3
        %s338 = sadd.s32 %s337, %s35
        %s339 = sld [smem:[#allocation5 + %s338]]
        %s340 = smul.u32 16, %s34
        %s341 = smul.u32 16, %s34
        %p342 = scmp.lt.s32.totalorder %s341, 47
        %s343 = scalar_select %p342, %s341, 47
        %s344 = smul.addr %s343, 4
        %s345 = scalar_lea.vmem %s6, %s344
        %s346 = smul.u32 16, %s34
        %p347 = scmp.eq.s32.totalorder %s35, 0
        // Predicated region
        $region78: #{_lambda_.5} parent=72 // pred_check
          %p348 = pneg %p347
        $region79: #{_lambda_.5} parent=72 // pred_check_branch
          %350 = sbr.rel (%p348) target = $region81
        $region80: #{_lambda_.5} parent=72 // pred_region
          %v351 = vld [vmem:[%s4] sm:$0x1]
          %v353 = vperm.slane %v351, 0
          %355 = vst [vmem:[#allocation2] sm:$0xff] %v353
          %356 = vst [vmem:[#allocation2 + $0x8] sm:$0xff] %v353
          %357 = vst [vmem:[#allocation2 + $0x10] sm:$0xff] %v353
          %358 = vst [vmem:[#allocation2 + $0x18] sm:$0xff] %v353
          %359 = vst [vmem:[#allocation2 + $0x20] sm:$0xff] %v353
          %360 = vst [vmem:[#allocation2 + $0x28] sm:$0xff] %v353
          %361 = vst [vmem:[#allocation2 + $0x30] sm:$0xff] %v353
          %362 = vst [vmem:[#allocation2 + $0x38] sm:$0xff] %v353
          %363 = vst [vmem:[#allocation2 + $0x40] sm:$0xff] %v353
          %364 = vst [vmem:[#allocation2 + $0x48] sm:$0xff] %v353
          %365 = vst [vmem:[#allocation2 + $0x50] sm:$0xff] %v353
          %366 = vst [vmem:[#allocation2 + $0x58] sm:$0xff] %v353
          %367 = vst [vmem:[#allocation2 + $0x60] sm:$0xff] %v353
          %368 = vst [vmem:[#allocation2 + $0x68] sm:$0xff] %v353
          %369 = vst [vmem:[#allocation2 + $0x70] sm:$0xff] %v353
          %370 = vst [vmem:[#allocation2 + $0x78] sm:$0xff] %v353
        $region81: #{_lambda_.5} parent=72 // pred_fallthru
          _
        %s371 = sld [smem:[#allocation4 + %s34]]
        %p372 = scmp.lt.s32.totalorder %s35, %s371
        // Predicated region
        $region82: #{_lambda_.5} parent=72 // pred_check
          %p373 = pneg %p372
        $region83: #{_lambda_.5} parent=72 // pred_check_branch
          %375 = sbr.rel (%p373) target = $region85
        $region84: #{_lambda_.5} parent=72 // pred_region
          %s376 = smul.u32 %s34, 3
          %s377 = sadd.s32 %s376, %s35
          %s378 = sld [smem:[#allocation5 + %s377]]
          %s379 = smul.u32 %s378, 128
          %s380 = sshra.s32 %s379, 3
          %s381 = sand.u32 %s379, 7
          %s382 = smul.addr %s380, 4
          %s383 = scalar_lea.vmem %s3, %s382
          %v384 = vld [vmem:[%s383] sm:$0xf]
          %v385 = vld [vmem:[%s383 + $0x4] sm:$0xf]
          %v386 = vld [vmem:[%s383 + $0x8] sm:$0xf]
          %v387 = vld [vmem:[%s383 + $0xc] sm:$0xf]
          %v388 = vld [vmem:[%s383 + $0x10] sm:$0xf]
          %v389 = vld [vmem:[%s383 + $0x14] sm:$0xf]
          %v390 = vld [vmem:[%s383 + $0x18] sm:$0xf]
          %v391 = vld [vmem:[%s383 + $0x1c] sm:$0xf]
          %v392 = vld [vmem:[%s383 + $0x20] sm:$0xf]
          %v393 = vld [vmem:[%s383 + $0x24] sm:$0xf]
          %v394 = vld [vmem:[%s383 + $0x28] sm:$0xf]
          %v395 = vld [vmem:[%s383 + $0x2c] sm:$0xf]
          %v396 = vld [vmem:[%s383 + $0x30] sm:$0xf]
          %v397 = vld [vmem:[%s383 + $0x34] sm:$0xf]
          %v398 = vld [vmem:[%s383 + $0x38] sm:$0xf]
          %v399 = vld [vmem:[%s383 + $0x3c] sm:$0xf]
          %v400 = vld [vmem:[#allocation2] sm:$0xff]
          %v401 = vld [vmem:[#allocation2 + $0x8] sm:$0xff]
          %v402 = vld [vmem:[#allocation2 + $0x10] sm:$0xff]
          %v403 = vld [vmem:[#allocation2 + $0x18] sm:$0xff]
          %v404 = vld [vmem:[#allocation2 + $0x20] sm:$0xff]
          %v405 = vld [vmem:[#allocation2 + $0x28] sm:$0xff]
          %v406 = vld [vmem:[#allocation2 + $0x30] sm:$0xff]
          %v407 = vld [vmem:[#allocation2 + $0x38] sm:$0xff]
          %v408 = vld [vmem:[#allocation2 + $0x40] sm:$0xff]
          %v409 = vld [vmem:[#allocation2 + $0x48] sm:$0xff]
          %v410 = vld [vmem:[#allocation2 + $0x50] sm:$0xff]
          %v411 = vld [vmem:[#allocation2 + $0x58] sm:$0xff]
          %v412 = vld [vmem:[#allocation2 + $0x60] sm:$0xff]
          %v413 = vld [vmem:[#allocation2 + $0x68] sm:$0xff]
          %v414 = vld [vmem:[#allocation2 + $0x70] sm:$0xff]
          %v415 = vld [vmem:[#allocation2 + $0x78] sm:$0xff]
          %v416 = vld [vmem:[%s314] sm:$0xf]
          %v417 = vld [vmem:[%s314 + $0x4] sm:$0xf]
          %v418 = vld [vmem:[%s314 + $0x8] sm:$0xf]
          %v419 = vld [vmem:[%s314 + $0xc] sm:$0xf]
          %v420 = vld [vmem:[%s314 + $0x10] sm:$0xf]
          %v421 = vld [vmem:[%s314 + $0x14] sm:$0xf]
          %v422 = vld [vmem:[%s314 + $0x18] sm:$0xf]
          %v423 = vld [vmem:[%s314 + $0x1c] sm:$0xf]
          %v424 = vld [vmem:[%s314 + $0x20] sm:$0xf]
          %v425 = vld [vmem:[%s314 + $0x24] sm:$0xf]
          %v426 = vld [vmem:[%s314 + $0x28] sm:$0xf]
          %v427 = vld [vmem:[%s314 + $0x2c] sm:$0xf]
          %v428 = vld [vmem:[%s314 + $0x30] sm:$0xf]
          %v429 = vld [vmem:[%s314 + $0x34] sm:$0xf]
          %v430 = vld [vmem:[%s314 + $0x38] sm:$0xf]
          %v431 = vld [vmem:[%s314 + $0x3c] sm:$0xf]
          %v448 = vunpack.c.l.b16 %v416
          %v449 = vunpack.c.l.b16 %v417
          %v450 = vunpack.c.l.b16 %v418
          %v451 = vunpack.c.l.b16 %v419
          %v452 = vunpack.c.l.b16 %v420
          %v453 = vunpack.c.l.b16 %v421
          %v454 = vunpack.c.l.b16 %v422
          %v455 = vunpack.c.l.b16 %v423
          %v456 = vunpack.c.l.b16 %v424
          %v457 = vunpack.c.l.b16 %v425
          %v458 = vunpack.c.l.b16 %v426
          %v459 = vunpack.c.l.b16 %v427
          %v460 = vunpack.c.l.b16 %v428
          %v461 = vunpack.c.l.b16 %v429
          %v462 = vunpack.c.l.b16 %v430
          %v463 = vunpack.c.l.b16 %v431
          %v464 = vpack.c.b16 %v449, %v448
          %v465 = vpack.c.b16 %v451, %v450
          %v466 = vpack.c.b16 %v453, %v452
          %v467 = vpack.c.b16 %v455, %v454
          %v468 = vpack.c.b16 %v457, %v456
          %v469 = vpack.c.b16 %v459, %v458
          %v470 = vpack.c.b16 %v461, %v460
          %v471 = vpack.c.b16 %v463, %v462
          %v496 = vunpack.c.l.b16 %v384
          %v497 = vunpack.c.l.b16 %v385
          %v498 = vunpack.c.l.b16 %v386
          %v499 = vunpack.c.l.b16 %v387
          %v500 = vunpack.c.l.b16 %v388
          %v501 = vunpack.c.l.b16 %v389
          %v502 = vunpack.c.l.b16 %v390
          %v503 = vunpack.c.l.b16 %v391
          %v504 = vunpack.c.l.b16 %v392
          %v505 = vunpack.c.l.b16 %v393
          %v506 = vunpack.c.l.b16 %v394
          %v507 = vunpack.c.l.b16 %v395
          %v508 = vunpack.c.l.b16 %v396
          %v509 = vunpack.c.l.b16 %v397
          %v510 = vunpack.c.l.b16 %v398
          %v511 = vunpack.c.l.b16 %v399
          %v512 = vpack.c.b16 %v497, %v496
          %v513 = vpack.c.b16 %v499, %v498
          %v514 = vpack.c.b16 %v501, %v500
          %v515 = vpack.c.b16 %v503, %v502
          %v516 = vpack.c.b16 %v505, %v504
          %v517 = vpack.c.b16 %v507, %v506
          %v518 = vpack.c.b16 %v509, %v508
          %v519 = vpack.c.b16 %v511, %v510
          %528 = vmatpush.bf16.msra.mxu0 %v519
          %529 = vmatpush.bf16.msra.mxu0 %v518
          %530 = vmatpush.bf16.msra.mxu0 %v517
          %531 = vmatpush.bf16.msra.mxu0 %v516
          %532 = vmatpush.bf16.msra.mxu0 %v515
          %533 = vmatpush.bf16.msra.mxu0 %v514
          %534 = vmatpush.bf16.msra.mxu0 %v513
          %535 = vmatpush.bf16.msra.mxu0 %v512
          %536 = vmatmul.bf16.gmra.mxu0 %v464
          %v537 = vpop.f32.mrf.mxu0
          %v538 = vadd.f32 0.0, %v537
          %v539 = vpop.f32.mrf.mxu0
          %v540 = vadd.f32 0.0, %v539
          %541 = vmatmul.bf16.gmra.mxu0 %v465
          %v542 = vpop.f32.mrf.mxu0
          %v543 = vadd.f32 0.0, %v542
          %v544 = vpop.f32.mrf.mxu0
          %v545 = vadd.f32 0.0, %v544
          %546 = vmatmul.bf16.gmra.mxu0 %v466
          %v547 = vpop.f32.mrf.mxu0
          %v548 = vadd.f32 0.0, %v547
          %v549 = vpop.f32.mrf.mxu0
          %v550 = vadd.f32 0.0, %v549
          %551 = vmatmul.bf16.gmra.mxu0 %v467
          %v552 = vpop.f32.mrf.mxu0
          %v553 = vadd.f32 0.0, %v552
          %v554 = vpop.f32.mrf.mxu0
          %v555 = vadd.f32 0.0, %v554
          %556 = vmatmul.bf16.gmra.mxu0 %v468
          %v557 = vpop.f32.mrf.mxu0
          %v558 = vadd.f32 0.0, %v557
          %v559 = vpop.f32.mrf.mxu0
          %v560 = vadd.f32 0.0, %v559
          %561 = vmatmul.bf16.gmra.mxu0 %v469
          %v562 = vpop.f32.mrf.mxu0
          %v563 = vadd.f32 0.0, %v562
          %v564 = vpop.f32.mrf.mxu0
          %v565 = vadd.f32 0.0, %v564
          %566 = vmatmul.bf16.gmra.mxu0 %v470
          %v567 = vpop.f32.mrf.mxu0
          %v568 = vadd.f32 0.0, %v567
          %v569 = vpop.f32.mrf.mxu0
          %v570 = vadd.f32 0.0, %v569
          %571 = vmatmul.bf16.gmra.mxu0 %v471
          %v572 = vpop.f32.mrf.mxu0
          %v573 = vadd.f32 0.0, %v572
          %v574 = vpop.f32.mrf.mxu0
          %v575 = vadd.f32 0.0, %v574
          %576 = vdwg.mxu0
          %v577 = vadd.f32 %v400, %v538
          %v578 = vadd.f32 %v401, %v540
          %v579 = vadd.f32 %v402, %v543
          %v580 = vadd.f32 %v403, %v545
          %v581 = vadd.f32 %v404, %v548
          %v582 = vadd.f32 %v405, %v550
          %v583 = vadd.f32 %v406, %v553
          %v584 = vadd.f32 %v407, %v555
          %v585 = vadd.f32 %v408, %v558
          %v586 = vadd.f32 %v409, %v560
          %v587 = vadd.f32 %v410, %v563
          %v588 = vadd.f32 %v411, %v565
          %v589 = vadd.f32 %v412, %v568
          %v590 = vadd.f32 %v413, %v570
          %v591 = vadd.f32 %v414, %v573
          %v592 = vadd.f32 %v415, %v575
          %593 = vst [vmem:[#allocation2] sm:$0xff] %v577
          %594 = vst [vmem:[#allocation2 + $0x8] sm:$0xff] %v578
          %595 = vst [vmem:[#allocation2 + $0x10] sm:$0xff] %v579
          %596 = vst [vmem:[#allocation2 + $0x18] sm:$0xff] %v580
          %597 = vst [vmem:[#allocation2 + $0x20] sm:$0xff] %v581
          %598 = vst [vmem:[#allocation2 + $0x28] sm:$0xff] %v582
          %599 = vst [vmem:[#allocation2 + $0x30] sm:$0xff] %v583
          %600 = vst [vmem:[#allocation2 + $0x38] sm:$0xff] %v584
          %601 = vst [vmem:[#allocation2 + $0x40] sm:$0xff] %v585
          %602 = vst [vmem:[#allocation2 + $0x48] sm:$0xff] %v586
          %603 = vst [vmem:[#allocation2 + $0x50] sm:$0xff] %v587
          %604 = vst [vmem:[#allocation2 + $0x58] sm:$0xff] %v588
          %605 = vst [vmem:[#allocation2 + $0x60] sm:$0xff] %v589
          %606 = vst [vmem:[#allocation2 + $0x68] sm:$0xff] %v590
          %607 = vst [vmem:[#allocation2 + $0x70] sm:$0xff] %v591
          %608 = vst [vmem:[#allocation2 + $0x78] sm:$0xff] %v592
        $region85: #{_lambda_.5} parent=72 // pred_fallthru
          _
        %p609 = scmp.eq.s32.totalorder %s35, 2
        // Predicated region
        $region86: #{_lambda_.5} parent=72 // pred_check
          %p610 = pneg %p609
        $region87: #{_lambda_.5} parent=72 // pred_check_branch
          %612 = sbr.rel (%p610) target = $region89
        $region88: #{_lambda_.5} parent=72 // pred_region
          %v613 = vld [vmem:[#allocation2] sm:$0xff]
          %v614 = vld [vmem:[#allocation2 + $0x8] sm:$0xff]
          %v615 = vld [vmem:[#allocation2 + $0x10] sm:$0xff]
          %v616 = vld [vmem:[#allocation2 + $0x18] sm:$0xff]
          %v617 = vld [vmem:[#allocation2 + $0x20] sm:$0xff]
          %v618 = vld [vmem:[#allocation2 + $0x28] sm:$0xff]
          %v619 = vld [vmem:[#allocation2 + $0x30] sm:$0xff]
          %v620 = vld [vmem:[#allocation2 + $0x38] sm:$0xff]
          %v621 = vld [vmem:[#allocation2 + $0x40] sm:$0xff]
          %v622 = vld [vmem:[#allocation2 + $0x48] sm:$0xff]
          %v623 = vld [vmem:[#allocation2 + $0x50] sm:$0xff]
          %v624 = vld [vmem:[#allocation2 + $0x58] sm:$0xff]
          %v625 = vld [vmem:[#allocation2 + $0x60] sm:$0xff]
          %v626 = vld [vmem:[#allocation2 + $0x68] sm:$0xff]
          %v627 = vld [vmem:[#allocation2 + $0x70] sm:$0xff]
          %v628 = vld [vmem:[#allocation2 + $0x78] sm:$0xff]
          %v629 = vmax.f32 %v613, 0.0
          %v630 = vmax.f32 %v614, 0.0
          %v631 = vmax.f32 %v615, 0.0
          %v632 = vmax.f32 %v616, 0.0
          %v633 = vmax.f32 %v617, 0.0
          %v634 = vmax.f32 %v618, 0.0
          %v635 = vmax.f32 %v619, 0.0
          %v636 = vmax.f32 %v620, 0.0
          %v637 = vmax.f32 %v621, 0.0
          %v638 = vmax.f32 %v622, 0.0
          %v639 = vmax.f32 %v623, 0.0
          %v640 = vmax.f32 %v624, 0.0
          %v641 = vmax.f32 %v625, 0.0
          %v642 = vmax.f32 %v626, 0.0
          %v643 = vmax.f32 %v627, 0.0
          %v644 = vmax.f32 %v628, 0.0
          %v645 = vpack.c.bf16 %v630, %v629
          %v646 = vpack.c.bf16 %v632, %v631
          %v647 = vpack.c.bf16 %v634, %v633
          %v648 = vpack.c.bf16 %v636, %v635
          %v649 = vpack.c.bf16 %v638, %v637
          %v650 = vpack.c.bf16 %v640, %v639
          %v651 = vpack.c.bf16 %v642, %v641
          %v652 = vpack.c.bf16 %v644, %v643
          %v653 = vld [vmem:[%s5] sm:$0xf]
          %v654 = vld [vmem:[%s5 + $0x4] sm:$0xf]
          %v655 = vld [vmem:[%s5 + $0x8] sm:$0xf]
          %v656 = vld [vmem:[%s5 + $0xc] sm:$0xf]
          %v657 = vld [vmem:[%s5 + $0x10] sm:$0xf]
          %v658 = vld [vmem:[%s5 + $0x14] sm:$0xf]
          %v659 = vld [vmem:[%s5 + $0x18] sm:$0xf]
          %v660 = vld [vmem:[%s5 + $0x1c] sm:$0xf]
          %v661 = vld [vmem:[%s5 + $0x20] sm:$0xf]
          %v662 = vld [vmem:[%s5 + $0x24] sm:$0xf]
          %v663 = vld [vmem:[%s5 + $0x28] sm:$0xf]
          %v664 = vld [vmem:[%s5 + $0x2c] sm:$0xf]
          %v665 = vld [vmem:[%s5 + $0x30] sm:$0xf]
          %v666 = vld [vmem:[%s5 + $0x34] sm:$0xf]
          %v667 = vld [vmem:[%s5 + $0x38] sm:$0xf]
          %v668 = vld [vmem:[%s5 + $0x3c] sm:$0xf]
          %v685 = vunpack.c.l.b16 %v653
          %v686 = vunpack.c.l.b16 %v654
          %v687 = vunpack.c.l.b16 %v655
          %v688 = vunpack.c.l.b16 %v656
          %v689 = vunpack.c.l.b16 %v657
          %v690 = vunpack.c.l.b16 %v658
          %v691 = vunpack.c.l.b16 %v659
          %v692 = vunpack.c.l.b16 %v660
          %v693 = vunpack.c.l.b16 %v661
          %v694 = vunpack.c.l.b16 %v662
          %v695 = vunpack.c.l.b16 %v663
          %v696 = vunpack.c.l.b16 %v664
          %v697 = vunpack.c.l.b16 %v665
          %v698 = vunpack.c.l.b16 %v666
          %v699 = vunpack.c.l.b16 %v667
          %v700 = vunpack.c.l.b16 %v668
          %v701 = vpack.c.b16 %v686, %v685
          %v702 = vpack.c.b16 %v688, %v687
          %v703 = vpack.c.b16 %v690, %v689
          %v704 = vpack.c.b16 %v692, %v691
          %v705 = vpack.c.b16 %v694, %v693
          %v706 = vpack.c.b16 %v696, %v695
          %v707 = vpack.c.b16 %v698, %v697
          %v708 = vpack.c.b16 %v700, %v699
          %717 = vmatpush.bf16.msra.mxu0 %v708
          %718 = vmatpush.bf16.msra.mxu0 %v707
          %719 = vmatpush.bf16.msra.mxu0 %v706
          %720 = vmatpush.bf16.msra.mxu0 %v705
          %721 = vmatpush.bf16.msra.mxu0 %v704
          %722 = vmatpush.bf16.msra.mxu0 %v703
          %723 = vmatpush.bf16.msra.mxu0 %v702
          %724 = vmatpush.bf16.msra.mxu0 %v701
          %725 = vmatmul.bf16.gmra.mxu0 %v645
          %v726 = vpop.f32.mrf.mxu0
          %v727 = vadd.f32 0.0, %v726
          %v728 = vpop.f32.mrf.mxu0
          %v729 = vadd.f32 0.0, %v728
          %730 = vmatmul.bf16.gmra.mxu0 %v646
          %v731 = vpop.f32.mrf.mxu0
          %v732 = vadd.f32 0.0, %v731
          %v733 = vpop.f32.mrf.mxu0
          %v734 = vadd.f32 0.0, %v733
          %735 = vmatmul.bf16.gmra.mxu0 %v647
          %v736 = vpop.f32.mrf.mxu0
          %v737 = vadd.f32 0.0, %v736
          %v738 = vpop.f32.mrf.mxu0
          %v739 = vadd.f32 0.0, %v738
          %740 = vmatmul.bf16.gmra.mxu0 %v648
          %v741 = vpop.f32.mrf.mxu0
          %v742 = vadd.f32 0.0, %v741
          %v743 = vpop.f32.mrf.mxu0
          %v744 = vadd.f32 0.0, %v743
          %745 = vmatmul.bf16.gmra.mxu0 %v649
          %v746 = vpop.f32.mrf.mxu0
          %v747 = vadd.f32 0.0, %v746
          %v748 = vpop.f32.mrf.mxu0
          %v749 = vadd.f32 0.0, %v748
          %750 = vmatmul.bf16.gmra.mxu0 %v650
          %v751 = vpop.f32.mrf.mxu0
          %v752 = vadd.f32 0.0, %v751
          %v753 = vpop.f32.mrf.mxu0
          %v754 = vadd.f32 0.0, %v753
          %755 = vmatmul.bf16.gmra.mxu0 %v651
          %v756 = vpop.f32.mrf.mxu0
          %v757 = vadd.f32 0.0, %v756
          %v758 = vpop.f32.mrf.mxu0
          %v759 = vadd.f32 0.0, %v758
          %760 = vmatmul.bf16.gmra.mxu0 %v652
          %v761 = vpop.f32.mrf.mxu0
          %v762 = vadd.f32 0.0, %v761
          %v763 = vpop.f32.mrf.mxu0
          %v764 = vadd.f32 0.0, %v763
          %765 = vdwg.mxu0
          %v766 = vpack.c.bf16 %v727, %v727
          %v767 = vpack.c.bf16 %v729, %v729
          %v768 = vpack.c.bf16 %v732, %v732
          %v769 = vpack.c.bf16 %v734, %v734
          %v770 = vpack.c.bf16 %v737, %v737
          %v771 = vpack.c.bf16 %v739, %v739
          %v772 = vpack.c.bf16 %v742, %v742
          %v773 = vpack.c.bf16 %v744, %v744
          %v774 = vpack.c.bf16 %v747, %v747
          %v775 = vpack.c.bf16 %v749, %v749
          %v776 = vpack.c.bf16 %v752, %v752
          %v777 = vpack.c.bf16 %v754, %v754
          %v778 = vpack.c.bf16 %v757, %v757
          %v779 = vpack.c.bf16 %v759, %v759
          %v780 = vpack.c.bf16 %v762, %v762
          %v781 = vpack.c.bf16 %v764, %v764
          %782 = vst [vmem:[%s345] sm:$0xf] %v766
          %783 = vst [vmem:[%s345 + $0x4] sm:$0xf] %v767
          %784 = vst [vmem:[%s345 + $0x8] sm:$0xf] %v768
          %785 = vst [vmem:[%s345 + $0xc] sm:$0xf] %v769
          %786 = vst [vmem:[%s345 + $0x10] sm:$0xf] %v770
          %787 = vst [vmem:[%s345 + $0x14] sm:$0xf] %v771
          %788 = vst [vmem:[%s345 + $0x18] sm:$0xf] %v772
          %789 = vst [vmem:[%s345 + $0x1c] sm:$0xf] %v773
          %790 = vst [vmem:[%s345 + $0x20] sm:$0xf] %v774
          %791 = vst [vmem:[%s345 + $0x24] sm:$0xf] %v775
          %792 = vst [vmem:[%s345 + $0x28] sm:$0xf] %v776
          %793 = vst [vmem:[%s345 + $0x2c] sm:$0xf] %v777
          %794 = vst [vmem:[%s345 + $0x30] sm:$0xf] %v778
          %795 = vst [vmem:[%s345 + $0x34] sm:$0xf] %v779
          %796 = vst [vmem:[%s345 + $0x38] sm:$0xf] %v780
          %797 = vst [vmem:[%s345 + $0x3c] sm:$0xf] %v781
        $region89: #{_lambda_.5} parent=72 // pred_fallthru
          _
        %s798 = smul.u32 16, %s34
        %p799 = scmp.lt.s32.totalorder %s798, 47
        %s800 = scalar_select %p799, %s798, 47
        %s801 = smul.addr %s800, 4
        %s802 = scalar_lea.vmem %s6, %s801
        // Predicated region
        $region90: #{_lambda_.5} parent=72 // pred_check
          %p803 = pneg %p157
        $region91: #{_lambda_.5} parent=72 // pred_check_branch
          %805 = sbr.rel (%p803) target = $region93
        $region92: #{_lambda_.5} parent=72 // pred_region
          %s806 = smul.u32 16, %s34
        $region93: #{_lambda_.5} parent=72 // pred_fallthru
          _
      $region73: #{_lambda_.5} parent=5 // pred_fallthru
        _
      %p807 = scmp.le.s32.totalorder 2, %s25
      // Predicated region
      $region94: #{_lambda_.5} parent=5 // pred_check
        %p808 = pneg %p807
      $region95: #{_lambda_.5} parent=5 // pred_check_branch
        %810 = sbr.rel (%p808) target = $region97
      $region96: #{_lambda_.5} parent=5 // pred_region
        %s811 = ssub.s32 %s25, 2
        // Predicated region
        $region98: #{_lambda_.5} parent=96 // pred_check
          %p812 = pneg %p163
        $region99: #{_lambda_.5} parent=96 // pred_check_branch
          %814 = sbr.rel (%p812) target = $region101
        $region100: #{_lambda_.5} parent=96 // pred_region
          %s815 = smul.u32 16, %s36
          %p816 = scmp.lt.s32.totalorder %s815, 47
          %s817 = scalar_select %p816, %s815, 47
          %s818 = smul.addr %s817, 4
          %s819 = scalar_lea.vmem %s6, %s818
        $region101: #{_lambda_.5} parent=96 // pred_fallthru
          _
      $region97: #{_lambda_.5} parent=5 // pred_fallthru
        _
    $region6: #{_lambda_.5} parent=1 // loop_footer
      %s29 = sadd.s32 1, %s25
    $region7: #{_lambda_.5} parent=1 // loop_footer_branch
      %24 = sbr.rel target = $region3
    $region8: #{_lambda_.5} parent=1 // loop_exit
      _

// kernel: _lambda_.7
$region0: #{_lambda_.7}
  #allocation0 [shape = 'u32[]', space=smem, size = 0x4, offset = 0x4, fixed_abs, tag = 'smem constant byte address 0x4 - core index']
  #allocation1 [shape = 'u32[72,128]{1,0:T(1,128)}', space=vmem, size = 0x9000, scoped, tag = 'internal scratch']
  %s0 = inlined_call_operand.vmem [shape: f32[8,128], index: 0, kind: input, shape index: {}]
  %s1 = inlined_call_operand.vmem [shape: bf16[128,128], index: 1, kind: input, shape index: {}]
  %s2 = inlined_call_operand.vmem [shape: f32[1,128], index: 2, kind: input, shape index: {}]
  %s3 = inlined_call_operand.vmem [shape: bf16[128,128], index: 3, kind: input, shape index: {}]
  %s4 = inlined_call_operand.vmem [shape: f32[1,128], index: 4, kind: input, shape index: {}]
  %s5 = inlined_call_operand.vmem [shape: f32[8,128], index: 5, kind: output, shape index: {}]
  %s6 = sld [smem:[#allocation0]]
  $region30: #{_lambda_.7} parent=0
    _
  %s8 = ssub.s32 1, %s6
  %s9 = scalar_select 0, %s8, %s6
  // Predicated region
  $region2: #{_lambda_.7} parent=0 // pred_check
    _
  $region3: #{_lambda_.7} parent=0 // pred_check_branch
    %11 = sbr.rel (0) target = $region5
  $region4: #{_lambda_.7} parent=0 // pred_region
    _
  $region5: #{_lambda_.7} parent=0 // pred_fallthru
    _
  // Predicated region
  $region6: #{_lambda_.7} parent=0 // pred_check
    _
  $region7: #{_lambda_.7} parent=0 // pred_check_branch
    %13 = sbr.rel (0) target = $region9
  $region8: #{_lambda_.7} parent=0 // pred_region
    _
  $region9: #{_lambda_.7} parent=0 // pred_fallthru
    _
  // Predicated region
  $region10: #{_lambda_.7} parent=0 // pred_check
    _
  $region11: #{_lambda_.7} parent=0 // pred_check_branch
    %15 = sbr.rel (0) target = $region13
  $region12: #{_lambda_.7} parent=0 // pred_region
    _
  $region13: #{_lambda_.7} parent=0 // pred_fallthru
    _
  // Predicated region
  $region14: #{_lambda_.7} parent=0 // pred_check
    _
  $region15: #{_lambda_.7} parent=0 // pred_check_branch
    %17 = sbr.rel (0) target = $region17
  $region16: #{_lambda_.7} parent=0 // pred_region
    _
  $region17: #{_lambda_.7} parent=0 // pred_fallthru
    _
  // Predicated region
  $region18: #{_lambda_.7} parent=0 // pred_check
    _
  $region19: #{_lambda_.7} parent=0 // pred_check_branch
    %19 = sbr.rel (0) target = $region21
  $region20: #{_lambda_.7} parent=0 // pred_region
    _
  $region21: #{_lambda_.7} parent=0 // pred_fallthru
    _
  %v20 = vld [vmem:[%s0] sm:$0xff]
  %v21 = vpack.c.bf16 %v20, %v20
  %v22 = vld [vmem:[%s1] sm:$0xf]
  %v23 = vld [vmem:[%s1 + $0x4] sm:$0xf]
  %v24 = vld [vmem:[%s1 + $0x8] sm:$0xf]
  %v25 = vld [vmem:[%s1 + $0xc] sm:$0xf]
  %v26 = vld [vmem:[%s1 + $0x10] sm:$0xf]
  %v27 = vld [vmem:[%s1 + $0x14] sm:$0xf]
  %v28 = vld [vmem:[%s1 + $0x18] sm:$0xf]
  %v29 = vld [vmem:[%s1 + $0x1c] sm:$0xf]
  %v30 = vld [vmem:[%s1 + $0x20] sm:$0xf]
  %v31 = vld [vmem:[%s1 + $0x24] sm:$0xf]
  %v32 = vld [vmem:[%s1 + $0x28] sm:$0xf]
  %v33 = vld [vmem:[%s1 + $0x2c] sm:$0xf]
  %v34 = vld [vmem:[%s1 + $0x30] sm:$0xf]
  %v35 = vld [vmem:[%s1 + $0x34] sm:$0xf]
  %v36 = vld [vmem:[%s1 + $0x38] sm:$0xf]
  %v37 = vld [vmem:[%s1 + $0x3c] sm:$0xf]
  %v38 = vld [vmem:[%s2] sm:$0x1]
  %v40 = vperm.slane %v38, 0
  %v58 = vunpack.c.l.b16 %v22
  %v59 = vunpack.c.l.b16 %v23
  %v60 = vunpack.c.l.b16 %v24
  %v61 = vunpack.c.l.b16 %v25
  %v62 = vunpack.c.l.b16 %v26
  %v63 = vunpack.c.l.b16 %v27
  %v64 = vunpack.c.l.b16 %v28
  %v65 = vunpack.c.l.b16 %v29
  %v66 = vunpack.c.l.b16 %v30
  %v67 = vunpack.c.l.b16 %v31
  %v68 = vunpack.c.l.b16 %v32
  %v69 = vunpack.c.l.b16 %v33
  %v70 = vunpack.c.l.b16 %v34
  %v71 = vunpack.c.l.b16 %v35
  %v72 = vunpack.c.l.b16 %v36
  %v73 = vunpack.c.l.b16 %v37
  %v74 = vpack.c.b16 %v59, %v58
  %v75 = vpack.c.b16 %v61, %v60
  %v76 = vpack.c.b16 %v63, %v62
  %v77 = vpack.c.b16 %v65, %v64
  %v78 = vpack.c.b16 %v67, %v66
  %v79 = vpack.c.b16 %v69, %v68
  %v80 = vpack.c.b16 %v71, %v70
  %v81 = vpack.c.b16 %v73, %v72
  %90 = vmatpush.bf16.msra.mxu0 %v81
  %91 = vmatpush.bf16.msra.mxu0 %v80
  %92 = vmatpush.bf16.msra.mxu0 %v79
  %93 = vmatpush.bf16.msra.mxu0 %v78
  %94 = vmatpush.bf16.msra.mxu0 %v77
  %95 = vmatpush.bf16.msra.mxu0 %v76
  %96 = vmatpush.bf16.msra.mxu0 %v75
  %97 = vmatpush.bf16.msra.mxu0 %v74
  %98 = vmatmul.bf16.gmra.mxu0 %v21
  %v99 = vpop.f32.mrf.mxu0
  %v100 = vadd.f32 %v40, %v99
  %v101 = vpop.f32.mrf.mxu0
  %102 = vdwg.mxu0
  %v103 = vmax.f32 %v100, 0.0
  %v104 = vpack.c.bf16 %v103, %v103
  %v105 = vld [vmem:[%s3] sm:$0xf]
  %v106 = vld [vmem:[%s3 + $0x4] sm:$0xf]
  %v107 = vld [vmem:[%s3 + $0x8] sm:$0xf]
  %v108 = vld [vmem:[%s3 + $0xc] sm:$0xf]
  %v109 = vld [vmem:[%s3 + $0x10] sm:$0xf]
  %v110 = vld [vmem:[%s3 + $0x14] sm:$0xf]
  %v111 = vld [vmem:[%s3 + $0x18] sm:$0xf]
  %v112 = vld [vmem:[%s3 + $0x1c] sm:$0xf]
  %v113 = vld [vmem:[%s3 + $0x20] sm:$0xf]
  %v114 = vld [vmem:[%s3 + $0x24] sm:$0xf]
  %v115 = vld [vmem:[%s3 + $0x28] sm:$0xf]
  %v116 = vld [vmem:[%s3 + $0x2c] sm:$0xf]
  %v117 = vld [vmem:[%s3 + $0x30] sm:$0xf]
  %v118 = vld [vmem:[%s3 + $0x34] sm:$0xf]
  %v119 = vld [vmem:[%s3 + $0x38] sm:$0xf]
  %v120 = vld [vmem:[%s3 + $0x3c] sm:$0xf]
  %v121 = vld [vmem:[%s4] sm:$0x1]
  %v123 = vperm.slane %v121, 0
  %v141 = vunpack.c.l.b16 %v105
  %v142 = vunpack.c.l.b16 %v106
  %v143 = vunpack.c.l.b16 %v107
  %v144 = vunpack.c.l.b16 %v108
  %v145 = vunpack.c.l.b16 %v109
  %v146 = vunpack.c.l.b16 %v110
  %v147 = vunpack.c.l.b16 %v111
  %v148 = vunpack.c.l.b16 %v112
  %v149 = vunpack.c.l.b16 %v113
  %v150 = vunpack.c.l.b16 %v114
  %v151 = vunpack.c.l.b16 %v115
  %v152 = vunpack.c.l.b16 %v116
  %v153 = vunpack.c.l.b16 %v117
  %v154 = vunpack.c.l.b16 %v118
  %v155 = vunpack.c.l.b16 %v119
  %v156 = vunpack.c.l.b16 %v120
  %v157 = vpack.c.b16 %v142, %v141
  %v158 = vpack.c.b16 %v144, %v143
  %v159 = vpack.c.b16 %v146, %v145
  %v160 = vpack.c.b16 %v148, %v147
  %v161 = vpack.c.b16 %v150, %v149
  %v162 = vpack.c.b16 %v152, %v151
  %v163 = vpack.c.b16 %v154, %v153
  %v164 = vpack.c.b16 %v156, %v155
  %173 = vmatpush.bf16.msra.mxu0 %v164
  %174 = vmatpush.bf16.msra.mxu0 %v163
  %175 = vmatpush.bf16.msra.mxu0 %v162
  %176 = vmatpush.bf16.msra.mxu0 %v161
  %177 = vmatpush.bf16.msra.mxu0 %v160
  %178 = vmatpush.bf16.msra.mxu0 %v159
  %179 = vmatpush.bf16.msra.mxu0 %v158
  %180 = vmatpush.bf16.msra.mxu0 %v157
  %181 = vmatmul.bf16.gmra.mxu0 %v104
  %v182 = vpop.f32.mrf.mxu0
  %v183 = vadd.f32 %v123, %v182
  %v184 = vpop.f32.mrf.mxu0
  %185 = vdwg.mxu0
  %186 = vst [vmem:[%s5] sm:$0xff] %v183
  // Predicated region
  $region22: #{_lambda_.7} parent=0 // pred_check
    _
  $region23: #{_lambda_.7} parent=0 // pred_check_branch
    %188 = sbr.rel (0) target = $region25
  $region24: #{_lambda_.7} parent=0 // pred_region
    _
  $region25: #{_lambda_.7} parent=0 // pred_fallthru
    _
  // Predicated region
  $region26: #{_lambda_.7} parent=0 // pred_check
    _
  $region27: #{_lambda_.7} parent=0 // pred_check_branch
    %190 = sbr.rel (0) target = $region29
  $region28: #{_lambda_.7} parent=0 // pred_region
    _
  $region29: #{_lambda_.7} parent=0 // pred_fallthru
    _

// kernel: _lambda_.6
$region0: #{_lambda_.6}
  #allocation0 [shape = 'u32[]', space=smem, size = 0x4, offset = 0x4, fixed_abs, tag = 'smem constant byte address 0x4 - core index']
  #allocation1 [shape = 'u32[72,128]{1,0:T(1,128)}', space=vmem, size = 0x9000, scoped, tag = 'internal scratch']
  #allocation2 [shape = 'f32[128,128]{1,0:T(8,128)}', space=vmem, size = 0x10000, scoped, tag = 'scratch operand']
  #allocation3 [shape = 's32[1]{0}', space=sflag, size = 0x4, scoped, tag = 'scoped memory for _lambda_.6']
  #allocation4 [shape = 'u8[512]{0}', space=smem, size = 0x200, scoped, tag = 'prefetched SMEM operand 0']
  #allocation5 [shape = 'u8[512]{0}', space=smem, size = 0x200, scoped, tag = 'prefetched SMEM operand 1']
  %s0 = inlined_call_operand.vmem [shape: s32[3], index: 0, kind: input, shape index: {}]
  %s1 = inlined_call_operand.vmem [shape: s32[9], index: 1, kind: input, shape index: {}]
  %s2 = inlined_call_operand.vmem [shape: bf16[384,384], index: 2, kind: input, shape index: {}]
  %s3 = inlined_call_operand.vmem [shape: bf16[384,128], index: 3, kind: input, shape index: {}]
  %s4 = inlined_call_operand.vmem [shape: f32[1,128], index: 4, kind: input, shape index: {}]
  %s5 = inlined_call_operand.vmem [shape: s32[1,384], index: 5, kind: input, shape index: {}]
  %s6 = inlined_call_operand.vmem [shape: f32[8,128], index: 6, kind: output, shape index: {}]
  %s7 = sld [smem:[#allocation0]]
  $region106: #{_lambda_.6} parent=0
    _
  %s9 = ssub.s32 1, %s7
  %s10 = scalar_select 0, %s9, %s7
  %s12 = sshll.u32 %s0, 4
  %s13 = int_to_ptr.vmem [resolvable:$true] %s12
  %15 = dma.vmem_to_smem %s13, 16, [#allocation4], [#allocation3]
  %s17 = sshll.u32 %s1, 4
  %s18 = int_to_ptr.vmem [resolvable:$true] %s17
  %20 = dma.vmem_to_smem %s18, 16, [#allocation5], [#allocation3]
  %22 = dma.done [#allocation3], 32
  %23 = sfence
  $region1: #{_lambda_.6} parent=0
    #allocation6 [shape = 'u8[65536]{0}', space=vmem, size = 0x10000, scoped, tag = 'input window, operand 2']
    loop: start=0, step=1, limit=11
    $region2: #{_lambda_.6} parent=1 // loop_pre_header
      _
    $region3: #{_lambda_.6} parent=1 // loop_header
      %s25 = sphi 0, %s29
      %p26 = scmp.ge.s32.totalorder %s25, 11
      %s32 = sphi 0, %s44
      %s33 = sphi 0, %s40
      %s34 = sphi 0, %s32
      %s35 = sphi 0, %s33
      %s36 = sphi 0, %s34
      %s37 = sphi 0, %s35
      %s55 = sphi 0, %s57
      %s58 = sphi 0, %s55
      %s59 = sphi 0, %s58
      %s75 = sphi 0, %s59
      %s79 = sphi 0, %s79
      %s81 = sphi 0, %s79
      %s82 = sphi 0, %s81
      %s96 = sphi 0, %s82
      %s100 = sphi 0, %s100
      %s102 = sphi 0, %s100
      %s103 = sphi 0, %s102
      %s117 = sphi 0, %s103
      %s123 = sphi 0, %s125
      %s126 = sphi 0, %s123
      %s127 = sphi 0, %s126
      %s143 = sphi 0, %s127
      %s147 = sphi 0, %s147
      %s149 = sphi 0, %s147
      %s150 = sphi 0, %s149
      %s164 = sphi 0, %s150
    $region4: #{_lambda_.6} parent=1 // loop_header_branch
      %28 = sbr.rel (%p26) target = $region8
    $region5: #{_lambda_.6} parent=1 // loop_body
      %s30 = ssub.s32 %s25, 1
      %s31 = ssub.s32 %s25, 2
      %s38 = sadd.s32 1, %s33
      %p39 = scmp.ge.s32.totalorder %s38, 3
      %s40 = scalar_select %p39, 0, %s38
      %s41 = sadd.s32 1, %s32
      %s42 = scalar_select %p39, %s41, %s32
      %p43 = scmp.ge.s32.totalorder %s42, 3
      %s44 = scalar_select %p43, 0, %s42
      %s45 = smul.u32 %s32, 3
      %s46 = sadd.s32 %s45, %s33
      %s47 = sld [smem:[#allocation5 + %s46]]
      %s48 = smul.u32 %s44, 3
      %s49 = sadd.s32 %s48, %s40
      %s50 = sld [smem:[#allocation5 + %s49]]
      %s51 = ssub.s32 %s32, %s44
      %s52 = ssub.s32 %s47, %s50
      %s53 = sor.u32 %s51, %s52
      %p54 = scmp.eq.s32.totalorder %s53, 0
      %s56 = sadd.s32 %s55, 1
      %s57 = scalar_select %p54, %s55, %s56
      %p60 = pneg %p54
      %p61 = scmp.eq.s32.totalorder %s25, 8
      %p62 = por %p60, %p61
      %p63 = scmp.ne.s32.totalorder %s55, %s58
      %p64 = scmp.eq.s32.totalorder %s25, 0
      %p65 = por %p63, %p64
      %p66 = scmp.ne.s32.totalorder %s55, %s58
      %p67 = scmp.eq.s32.totalorder %s30, 8
      %p68 = por %p66, %p67
      %p69 = scmp.ne.s32.totalorder %s58, %s59
      %p70 = scmp.eq.s32.totalorder %s30, 0
      %p71 = por %p69, %p70
      %p72 = scmp.ne.s32.totalorder %s58, %s59
      %p73 = scmp.eq.s32.totalorder %s31, 8
      %p74 = por %p72, %p73
      %p76 = scmp.ne.s32.totalorder %s59, %s75
      %p77 = scmp.eq.s32.totalorder %s31, 0
      %p78 = por %p76, %p77
      %s80 = sadd.s32 %s79, 1
      %p83 = scmp.eq.s32.totalorder %s25, 8
      %p84 = scmp.ne.s32.totalorder %s79, %s81
      %p85 = scmp.eq.s32.totalorder %s25, 0
      %p86 = por %p84, %p85
      %p87 = scmp.ne.s32.totalorder %s79, %s81
      %p88 = scmp.eq.s32.totalorder %s30, 8
      %p89 = por %p87, %p88
      %p90 = scmp.ne.s32.totalorder %s81, %s82
      %p91 = scmp.eq.s32.totalorder %s30, 0
      %p92 = por %p90, %p91
      %p93 = scmp.ne.s32.totalorder %s81, %s82
      %p94 = scmp.eq.s32.totalorder %s31, 8
      %p95 = por %p93, %p94
      %p97 = scmp.ne.s32.totalorder %s82, %s96
      %p98 = scmp.eq.s32.totalorder %s31, 0
      %p99 = por %p97, %p98
      %s101 = sadd.s32 %s100, 1
      %p104 = scmp.eq.s32.totalorder %s25, 8
      %p105 = scmp.ne.s32.totalorder %s100, %s102
      %p106 = scmp.eq.s32.totalorder %s25, 0
      %p107 = por %p105, %p106
      %p108 = scmp.ne.s32.totalorder %s100, %s102
      %p109 = scmp.eq.s32.totalorder %s30, 8
      %p110 = por %p108, %p109
      %p111 = scmp.ne.s32.totalorder %s102, %s103
      %p112 = scmp.eq.s32.totalorder %s30, 0
      %p113 = por %p111, %p112
      %p114 = scmp.ne.s32.totalorder %s102, %s103
      %p115 = scmp.eq.s32.totalorder %s31, 8
      %p116 = por %p114, %p115
      %p118 = scmp.ne.s32.totalorder %s103, %s117
      %p119 = scmp.eq.s32.totalorder %s31, 0
      %p120 = por %p118, %p119
      %s121 = ssub.s32 %s32, %s44
      %p122 = scmp.eq.s32.totalorder %s121, 0
      %s124 = sadd.s32 %s123, 1
      %s125 = scalar_select %p122, %s123, %s124
      %p128 = pneg %p122
      %p129 = scmp.eq.s32.totalorder %s25, 8
      %p130 = por %p128, %p129
      %p131 = scmp.ne.s32.totalorder %s123, %s126
      %p132 = scmp.eq.s32.totalorder %s25, 0
      %p133 = por %p131, %p132
      %p134 = scmp.ne.s32.totalorder %s123, %s126
      %p135 = scmp.eq.s32.totalorder %s30, 8
      %p136 = por %p134, %p135
      %p137 = scmp.ne.s32.totalorder %s126, %s127
      %p138 = scmp.eq.s32.totalorder %s30, 0
      %p139 = por %p137, %p138
      %p140 = scmp.ne.s32.totalorder %s126, %s127
      %p141 = scmp.eq.s32.totalorder %s31, 8
      %p142 = por %p140, %p141
      %p144 = scmp.ne.s32.totalorder %s127, %s143
      %p145 = scmp.eq.s32.totalorder %s31, 0
      %p146 = por %p144, %p145
      %s148 = sadd.s32 %s147, 1
      %p151 = scmp.eq.s32.totalorder %s25, 8
      %p152 = scmp.ne.s32.totalorder %s147, %s149
      %p153 = scmp.eq.s32.totalorder %s25, 0
      %p154 = por %p152, %p153
      %p155 = scmp.ne.s32.totalorder %s147, %s149
      %p156 = scmp.eq.s32.totalorder %s30, 8
      %p157 = por %p155, %p156
      %p158 = scmp.ne.s32.totalorder %s149, %s150
      %p159 = scmp.eq.s32.totalorder %s30, 0
      %p160 = por %p158, %p159
      %p161 = scmp.ne.s32.totalorder %s149, %s150
      %p162 = scmp.eq.s32.totalorder %s31, 8
      %p163 = por %p161, %p162
      %p165 = scmp.ne.s32.totalorder %s150, %s164
      %p166 = scmp.eq.s32.totalorder %s31, 0
      %p167 = por %p165, %p166
      %p168 = scmp.le.s32.totalorder 1, %s25
      %p169 = scmp.lt.s32.totalorder %s25, 10
      %p170 = pnand %p168, %p169
      %p171 = pneg %p170
      // Predicated region
      $region9: #{_lambda_.6} parent=5 // pred_check
        _
      $region10: #{_lambda_.6} parent=5 // pred_check_branch
        %173 = sbr.rel (%p170) target = $region12
      $region11: #{_lambda_.6} parent=5 // pred_region
        %s174 = ssub.s32 %s25, 1
        // Predicated region
        $region13: #{_lambda_.6} parent=11 // pred_check
          %p175 = pneg %p92
        $region14: #{_lambda_.6} parent=11 // pred_check_branch
          %177 = sbr.rel (%p175) target = $region16
        $region15: #{_lambda_.6} parent=11 // pred_region
          _
        $region16: #{_lambda_.6} parent=11 // pred_fallthru
          _
        // Predicated region
        $region17: #{_lambda_.6} parent=11 // pred_check
          %p178 = pneg %p113
        $region18: #{_lambda_.6} parent=11 // pred_check_branch
          %180 = sbr.rel (%p178) target = $region20
        $region19: #{_lambda_.6} parent=11 // pred_region
          _
        $region20: #{_lambda_.6} parent=11 // pred_fallthru
          _
      $region12: #{_lambda_.6} parent=5 // pred_fallthru
        _
      %p181 = scmp.lt.s32.totalorder %s25, 9
      // Predicated region
      $region21: #{_lambda_.6} parent=5 // pred_check
        %p182 = pneg %p181
      $region22: #{_lambda_.6} parent=5 // pred_check_branch
        %184 = sbr.rel (%p182) target = $region24
      $region23: #{_lambda_.6} parent=5 // pred_region
        // Predicated region
        $region25: #{_lambda_.6} parent=23 // pred_check
          %p185 = pneg %p65
        $region26: #{_lambda_.6} parent=23 // pred_check_branch
          %187 = sbr.rel (%p185) target = $region28
        $region27: #{_lambda_.6} parent=23 // pred_region
          %s188 = sand.u32 %s55, 1
          %s189 = sand.u32 %s55, 1
          %s190 = smul.addr %s189, 64
          %s191 = scalar_lea.vmem [#allocation6], %s190
          %s192 = smul.u32 %s32, 3
          %s193 = sadd.s32 %s192, %s33
          %s194 = sld [smem:[#allocation5 + %s193]]
          %s195 = smul.u32 16, %s32
          %s196 = smul.addr %s195, 3
          %s197 = sadd.s32 %s194, %s196
          %s198 = smul.addr %s197, 4
          %s199 = scalar_lea.vmem %s2, %s198
          // Predicated region
          $region29: #{_lambda_.6} parent=27 // pred_check
            _
          $region30: #{_lambda_.6} parent=27 // pred_check_branch
            %201 = sbr.rel (0) target = $region32
          $region31: #{_lambda_.6} parent=27 // pred_region
            // Predicated region
            $region33: #{_lambda_.6} parent=31 // pred_check
              _
            $region34: #{_lambda_.6} parent=31 // pred_check_branch
              %203 = sbr.rel target = $region36
            $region35: #{_lambda_.6} parent=31 // pred_region
              // Predicated region
              $region48: #{_lambda_.6} parent=35 // pred_check
                _
              $region49: #{_lambda_.6} parent=35 // pred_check_branch
                %249 = sbr.rel (0) target = $region51
              $region50: #{_lambda_.6} parent=35 // pred_region
                loop: start=0, step=1, limit=1
                $region52: #{_lambda_.6} parent=50 // loop_pre_header
                  _
                $region53: #{_lambda_.6} parent=50 // loop_header
                  %s251 = sphi 0, %s255
                  %p252 = scmp.ge.s32.totalorder %s251, 1
                  %s256 = sphi %s199, %s199
                  %s257 = sphi %s191, %s191
                $region54: #{_lambda_.6} parent=50 // loop_header_branch
                  %254 = sbr.rel (%p252) target = $region58
                $region55: #{_lambda_.6} parent=50 // loop_body
                  _
                $region56: #{_lambda_.6} parent=50 // loop_footer
                  %s255 = sadd.s32 1, %s251
                $region57: #{_lambda_.6} parent=50 // loop_footer_branch
                  %250 = sbr.rel target = $region53
                $region58: #{_lambda_.6} parent=50 // loop_exit
                  _
                %s259 = ssub.s32 16, 1
                loop: start=0, step=1, limit=1
                $region59: #{_lambda_.6} parent=50 // loop_pre_header
                  _
                $region60: #{_lambda_.6} parent=50 // loop_header
                  %s261 = sphi 0, %s265
                  %p262 = scmp.ge.s32.totalorder %s261, 1
                  %s266 = sphi %s199, %s199
                  %s267 = sphi %s191, %s191
                $region61: #{_lambda_.6} parent=50 // loop_header_branch
                  %264 = sbr.rel (%p262) target = $region65
                $region62: #{_lambda_.6} parent=50 // loop_body
                  %v268 = vld [vmem:[%s266] sm:%s259]
                  %269 = vst [vmem:[%s267] sm:%s259] %v268
                  %v270 = vld [vmem:[%s266 + $0xc] sm:%s259]
                  %271 = vst [vmem:[%s267 + $0x4] sm:%s259] %v270
                  %v272 = vld [vmem:[%s266 + $0x18] sm:%s259]
                  %273 = vst [vmem:[%s267 + $0x8] sm:%s259] %v272
                  %v274 = vld [vmem:[%s266 + $0x24] sm:%s259]
                  %275 = vst [vmem:[%s267 + $0xc] sm:%s259] %v274
                  %v276 = vld [vmem:[%s266 + $0x30] sm:%s259]
                  %277 = vst [vmem:[%s267 + $0x10] sm:%s259] %v276
                  %v278 = vld [vmem:[%s266 + $0x3c] sm:%s259]
                  %279 = vst [vmem:[%s267 + $0x14] sm:%s259] %v278
                  %v280 = vld [vmem:[%s266 + $0x48] sm:%s259]
                  %281 = vst [vmem:[%s267 + $0x18] sm:%s259] %v280
                  %v282 = vld [vmem:[%s266 + $0x54] sm:%s259]
                  %283 = vst [vmem:[%s267 + $0x1c] sm:%s259] %v282
                  %v284 = vld [vmem:[%s266 + $0x60] sm:%s259]
                  %285 = vst [vmem:[%s267 + $0x20] sm:%s259] %v284
                  %v286 = vld [vmem:[%s266 + $0x6c] sm:%s259]
                  %287 = vst [vmem:[%s267 + $0x24] sm:%s259] %v286
                  %v288 = vld [vmem:[%s266 + $0x78] sm:%s259]
                  %289 = vst [vmem:[%s267 + $0x28] sm:%s259] %v288
                  %v290 = vld [vmem:[%s266 + $0x84] sm:%s259]
                  %291 = vst [vmem:[%s267 + $0x2c] sm:%s259] %v290
                  %v292 = vld [vmem:[%s266 + $0x90] sm:%s259]
                  %293 = vst [vmem:[%s267 + $0x30] sm:%s259] %v292
                  %v294 = vld [vmem:[%s266 + $0x9c] sm:%s259]
                  %295 = vst [vmem:[%s267 + $0x34] sm:%s259] %v294
                  %v296 = vld [vmem:[%s266 + $0xa8] sm:%s259]
                  %297 = vst [vmem:[%s267 + $0x38] sm:%s259] %v296
                  %v298 = vld [vmem:[%s266 + $0xb4] sm:%s259]
                  %299 = vst [vmem:[%s267 + $0x3c] sm:%s259] %v298
                $region63: #{_lambda_.6} parent=50 // loop_footer
                  %s265 = sadd.s32 1, %s261
                $region64: #{_lambda_.6} parent=50 // loop_footer_branch
                  %260 = sbr.rel target = $region60
                $region65: #{_lambda_.6} parent=50 // loop_exit
                  _
              $region51: #{_lambda_.6} parent=35 // pred_fallthru
                _
            $region36: #{_lambda_.6} parent=31 // pred_fallthru
              _
            // Predicated region
            $region37: #{_lambda_.6} parent=31 // pred_check
              _
            $region38: #{_lambda_.6} parent=31 // pred_check_branch
              %205 = sbr.rel (0) target = $region40
            $region39: #{_lambda_.6} parent=31 // pred_region
              %s207 = ssub.s32 16, 1
              loop: start=0, step=1, limit=1
              $region41: #{_lambda_.6} parent=39 // loop_pre_header
                _
              $region42: #{_lambda_.6} parent=39 // loop_header
                %s209 = sphi 0, %s213
                %p210 = scmp.ge.s32.totalorder %s209, 1
                %s214 = sphi %s199, %s199
                %s215 = sphi %s191, %s191
              $region43: #{_lambda_.6} parent=39 // loop_header_branch
                %212 = sbr.rel (%p210) target = $region47
              $region44: #{_lambda_.6} parent=39 // loop_body
                %v216 = vld [vmem:[%s214] sm:%s207]
                %217 = vst [vmem:[%s215] sm:%s207] %v216
                %v218 = vld [vmem:[%s214 + $0xc] sm:%s207]
                %219 = vst [vmem:[%s215 + $0x4] sm:%s207] %v218
                %v220 = vld [vmem:[%s214 + $0x18] sm:%s207]
                %221 = vst [vmem:[%s215 + $0x8] sm:%s207] %v220
                %v222 = vld [vmem:[%s214 + $0x24] sm:%s207]
                %223 = vst [vmem:[%s215 + $0xc] sm:%s207] %v222
                %v224 = vld [vmem:[%s214 + $0x30] sm:%s207]
                %225 = vst [vmem:[%s215 + $0x10] sm:%s207] %v224
                %v226 = vld [vmem:[%s214 + $0x3c] sm:%s207]
                %227 = vst [vmem:[%s215 + $0x14] sm:%s207] %v226
                %v228 = vld [vmem:[%s214 + $0x48] sm:%s207]
                %229 = vst [vmem:[%s215 + $0x18] sm:%s207] %v228
                %v230 = vld [vmem:[%s214 + $0x54] sm:%s207]
                %231 = vst [vmem:[%s215 + $0x1c] sm:%s207] %v230
                %v232 = vld [vmem:[%s214 + $0x60] sm:%s207]
                %233 = vst [vmem:[%s215 + $0x20] sm:%s207] %v232
                %v234 = vld [vmem:[%s214 + $0x6c] sm:%s207]
                %235 = vst [vmem:[%s215 + $0x24] sm:%s207] %v234
                %v236 = vld [vmem:[%s214 + $0x78] sm:%s207]
                %237 = vst [vmem:[%s215 + $0x28] sm:%s207] %v236
                %v238 = vld [vmem:[%s214 + $0x84] sm:%s207]
                %239 = vst [vmem:[%s215 + $0x2c] sm:%s207] %v238
                %v240 = vld [vmem:[%s214 + $0x90] sm:%s207]
                %241 = vst [vmem:[%s215 + $0x30] sm:%s207] %v240
                %v242 = vld [vmem:[%s214 + $0x9c] sm:%s207]
                %243 = vst [vmem:[%s215 + $0x34] sm:%s207] %v242
                %v244 = vld [vmem:[%s214 + $0xa8] sm:%s207]
                %245 = vst [vmem:[%s215 + $0x38] sm:%s207] %v244
                %v246 = vld [vmem:[%s214 + $0xb4] sm:%s207]
                %247 = vst [vmem:[%s215 + $0x3c] sm:%s207] %v246
              $region45: #{_lambda_.6} parent=39 // loop_footer
                %s213 = sadd.s32 1, %s209
              $region46: #{_lambda_.6} parent=39 // loop_footer_branch
                %208 = sbr.rel target = $region42
              $region47: #{_lambda_.6} parent=39 // loop_exit
                _
            $region40: #{_lambda_.6} parent=31 // pred_fallthru
              _
          $region32: #{_lambda_.6} parent=27 // pred_fallthru
            _
          %300 = vnop
        $region28: #{_lambda_.6} parent=23 // pred_fallthru
          _
        // Predicated region
        $region66: #{_lambda_.6} parent=23 // pred_check
          %p301 = pneg %p133
        $region67: #{_lambda_.6} parent=23 // pred_check_branch
          %303 = sbr.rel (%p301) target = $region69
        $region68: #{_lambda_.6} parent=23 // pred_region
          %p304 = scmp.lt.s32.totalorder %s32, 2
          %s305 = scalar_select %p304, %s32, 2
          %s306 = scalar_lea.vmem %s5, %s305
        $region69: #{_lambda_.6} parent=23 // pred_fallthru
          _
      $region24: #{_lambda_.6} parent=5 // pred_fallthru
        _
      %p307 = scmp.le.s32.totalorder 1, %s25
      %p308 = scmp.lt.s32.totalorder %s25, 10
      %p309 = pnand %p307, %p308
      %p310 = pneg %p309
      // Predicated region
      $region70: #{_lambda_.6} parent=5 // pred_check
        _
      $region71: #{_lambda_.6} parent=5 // pred_check_branch
        %312 = sbr.rel (%p309) target = $region73
      $region72: #{_lambda_.6} parent=5 // pred_region
        %s313 = ssub.s32 %s25, 1
        %s314 = sand.u32 %s58, 1
        %s315 = sand.u32 %s58, 1
        %s316 = smul.addr %s315, 64
        %s317 = scalar_lea.vmem [#allocation6], %s316
        // Predicated region
        $region74: #{_lambda_.6} parent=72 // pred_check
          %p318 = pneg %p71
        $region75: #{_lambda_.6} parent=72 // pred_check_branch
          %320 = sbr.rel (%p318) target = $region77
        $region76: #{_lambda_.6} parent=72 // pred_region
          _
        $region77: #{_lambda_.6} parent=72 // pred_fallthru
          _
        %s321 = sand.u32 %s58, 1
        %s322 = sand.u32 %s58, 1
        %s323 = smul.addr %s322, 64
        %s324 = scalar_lea.vmem [#allocation6], %s323
        %p325 = pneg %p71
        %p326 = pneg %p68
        %p327 = pneg %p92
        %p328 = pneg %p89
        %p329 = pneg %p113
        %p330 = pneg %p110
        %p331 = scmp.lt.s32.totalorder %s34, 2
        %s332 = scalar_select %p331, %s34, 2
        %s333 = scalar_lea.vmem %s5, %s332
        %p334 = pneg %p139
        %p335 = pneg %p136
        %p336 = pneg %p160
        %p337 = pneg %p157
        %s338 = smul.u32 %s34, 3
        %s339 = sadd.s32 %s338, %s35
        %s340 = sld [smem:[#allocation5 + %s339]]
        %s341 = smul.u32 16, %s34
        %p342 = scmp.lt.s32.totalorder %s34, 2
        %s343 = scalar_select %p342, %s34, 2
        %s344 = scalar_lea.vmem %s5, %s343
        %p345 = scmp.eq.s32.totalorder %s34, 0
        %p346 = scmp.eq.s32.totalorder %s35, 0
        %p347 = pnand %p345, %p346
        %p348 = pneg %p347
        // Predicated region
        $region78: #{_lambda_.6} parent=72 // pred_check
          _
        $region79: #{_lambda_.6} parent=72 // pred_check_branch
          %350 = sbr.rel (%p347) target = $region81
        $region80: #{_lambda_.6} parent=72 // pred_region
          %351 = vst [vmem:[%s6] sm:$0xff] 0.0
        $region81: #{_lambda_.6} parent=72 // pred_fallthru
          _
        // Predicated region
        $region82: #{_lambda_.6} parent=72 // pred_check
          %p352 = pneg %p346
        $region83: #{_lambda_.6} parent=72 // pred_check_branch
          %354 = sbr.rel (%p352) target = $region85
        $region84: #{_lambda_.6} parent=72 // pred_region
          %v355 = vld [vmem:[%s4] sm:$0x1]
          %v357 = vperm.slane %v355, 0
          %359 = vst [vmem:[#allocation2] sm:$0xff] %v357
          %360 = vst [vmem:[#allocation2 + $0x8] sm:$0xff] %v357
          %361 = vst [vmem:[#allocation2 + $0x10] sm:$0xff] %v357
          %362 = vst [vmem:[#allocation2 + $0x18] sm:$0xff] %v357
          %363 = vst [vmem:[#allocation2 + $0x20] sm:$0xff] %v357
          %364 = vst [vmem:[#allocation2 + $0x28] sm:$0xff] %v357
          %365 = vst [vmem:[#allocation2 + $0x30] sm:$0xff] %v357
          %366 = vst [vmem:[#allocation2 + $0x38] sm:$0xff] %v357
          %367 = vst [vmem:[#allocation2 + $0x40] sm:$0xff] %v357
          %368 = vst [vmem:[#allocation2 + $0x48] sm:$0xff] %v357
          %369 = vst [vmem:[#allocation2 + $0x50] sm:$0xff] %v357
          %370 = vst [vmem:[#allocation2 + $0x58] sm:$0xff] %v357
          %371 = vst [vmem:[#allocation2 + $0x60] sm:$0xff] %v357
          %372 = vst [vmem:[#allocation2 + $0x68] sm:$0xff] %v357
          %373 = vst [vmem:[#allocation2 + $0x70] sm:$0xff] %v357
          %374 = vst [vmem:[#allocation2 + $0x78] sm:$0xff] %v357
        $region85: #{_lambda_.6} parent=72 // pred_fallthru
          _
        %s375 = sld [smem:[#allocation4 + %s34]]
        %p376 = scmp.lt.s32.totalorder %s35, %s375
        // Predicated region
        $region86: #{_lambda_.6} parent=72 // pred_check
          %p377 = pneg %p376
        $region87: #{_lambda_.6} parent=72 // pred_check_branch
          %379 = sbr.rel (%p377) target = $region89
        $region88: #{_lambda_.6} parent=72 // pred_region
          %s380 = smul.u32 %s34, 3
          %s381 = sadd.s32 %s380, %s35
          %s382 = sld [smem:[#allocation5 + %s381]]
          %s383 = smul.u32 %s382, 128
          %s384 = sshra.s32 %s383, 3
          %s385 = sand.u32 %s383, 7
          %s386 = smul.addr %s384, 4
          %s387 = scalar_lea.vmem %s3, %s386
          %v388 = vld [vmem:[%s387] sm:$0xf]
          %v389 = vld [vmem:[%s387 + $0x4] sm:$0xf]
          %v390 = vld [vmem:[%s387 + $0x8] sm:$0xf]
          %v391 = vld [vmem:[%s387 + $0xc] sm:$0xf]
          %v392 = vld [vmem:[%s387 + $0x10] sm:$0xf]
          %v393 = vld [vmem:[%s387 + $0x14] sm:$0xf]
          %v394 = vld [vmem:[%s387 + $0x18] sm:$0xf]
          %v395 = vld [vmem:[%s387 + $0x1c] sm:$0xf]
          %v396 = vld [vmem:[%s387 + $0x20] sm:$0xf]
          %v397 = vld [vmem:[%s387 + $0x24] sm:$0xf]
          %v398 = vld [vmem:[%s387 + $0x28] sm:$0xf]
          %v399 = vld [vmem:[%s387 + $0x2c] sm:$0xf]
          %v400 = vld [vmem:[%s387 + $0x30] sm:$0xf]
          %v401 = vld [vmem:[%s387 + $0x34] sm:$0xf]
          %v402 = vld [vmem:[%s387 + $0x38] sm:$0xf]
          %v403 = vld [vmem:[%s387 + $0x3c] sm:$0xf]
          %v404 = vld [vmem:[#allocation2] sm:$0xff]
          %v405 = vld [vmem:[#allocation2 + $0x8] sm:$0xff]
          %v406 = vld [vmem:[#allocation2 + $0x10] sm:$0xff]
          %v407 = vld [vmem:[#allocation2 + $0x18] sm:$0xff]
          %v408 = vld [vmem:[#allocation2 + $0x20] sm:$0xff]
          %v409 = vld [vmem:[#allocation2 + $0x28] sm:$0xff]
          %v410 = vld [vmem:[#allocation2 + $0x30] sm:$0xff]
          %v411 = vld [vmem:[#allocation2 + $0x38] sm:$0xff]
          %v412 = vld [vmem:[#allocation2 + $0x40] sm:$0xff]
          %v413 = vld [vmem:[#allocation2 + $0x48] sm:$0xff]
          %v414 = vld [vmem:[#allocation2 + $0x50] sm:$0xff]
          %v415 = vld [vmem:[#allocation2 + $0x58] sm:$0xff]
          %v416 = vld [vmem:[#allocation2 + $0x60] sm:$0xff]
          %v417 = vld [vmem:[#allocation2 + $0x68] sm:$0xff]
          %v418 = vld [vmem:[#allocation2 + $0x70] sm:$0xff]
          %v419 = vld [vmem:[#allocation2 + $0x78] sm:$0xff]
          %v420 = vld [vmem:[%s317] sm:$0xf]
          %v421 = vld [vmem:[%s317 + $0x4] sm:$0xf]
          %v422 = vld [vmem:[%s317 + $0x8] sm:$0xf]
          %v423 = vld [vmem:[%s317 + $0xc] sm:$0xf]
          %v424 = vld [vmem:[%s317 + $0x10] sm:$0xf]
          %v425 = vld [vmem:[%s317 + $0x14] sm:$0xf]
          %v426 = vld [vmem:[%s317 + $0x18] sm:$0xf]
          %v427 = vld [vmem:[%s317 + $0x1c] sm:$0xf]
          %v428 = vld [vmem:[%s317 + $0x20] sm:$0xf]
          %v429 = vld [vmem:[%s317 + $0x24] sm:$0xf]
          %v430 = vld [vmem:[%s317 + $0x28] sm:$0xf]
          %v431 = vld [vmem:[%s317 + $0x2c] sm:$0xf]
          %v432 = vld [vmem:[%s317 + $0x30] sm:$0xf]
          %v433 = vld [vmem:[%s317 + $0x34] sm:$0xf]
          %v434 = vld [vmem:[%s317 + $0x38] sm:$0xf]
          %v435 = vld [vmem:[%s317 + $0x3c] sm:$0xf]
          %v452 = vunpack.c.l.b16 %v420
          %v453 = vunpack.c.l.b16 %v421
          %v454 = vunpack.c.l.b16 %v422
          %v455 = vunpack.c.l.b16 %v423
          %v456 = vunpack.c.l.b16 %v424
          %v457 = vunpack.c.l.b16 %v425
          %v458 = vunpack.c.l.b16 %v426
          %v459 = vunpack.c.l.b16 %v427
          %v460 = vunpack.c.l.b16 %v428
          %v461 = vunpack.c.l.b16 %v429
          %v462 = vunpack.c.l.b16 %v430
          %v463 = vunpack.c.l.b16 %v431
          %v464 = vunpack.c.l.b16 %v432
          %v465 = vunpack.c.l.b16 %v433
          %v466 = vunpack.c.l.b16 %v434
          %v467 = vunpack.c.l.b16 %v435
          %v468 = vpack.c.b16 %v453, %v452
          %v469 = vpack.c.b16 %v455, %v454
          %v470 = vpack.c.b16 %v457, %v456
          %v471 = vpack.c.b16 %v459, %v458
          %v472 = vpack.c.b16 %v461, %v460
          %v473 = vpack.c.b16 %v463, %v462
          %v474 = vpack.c.b16 %v465, %v464
          %v475 = vpack.c.b16 %v467, %v466
          %v500 = vunpack.c.l.b16 %v388
          %v501 = vunpack.c.l.b16 %v389
          %v502 = vunpack.c.l.b16 %v390
          %v503 = vunpack.c.l.b16 %v391
          %v504 = vunpack.c.l.b16 %v392
          %v505 = vunpack.c.l.b16 %v393
          %v506 = vunpack.c.l.b16 %v394
          %v507 = vunpack.c.l.b16 %v395
          %v508 = vunpack.c.l.b16 %v396
          %v509 = vunpack.c.l.b16 %v397
          %v510 = vunpack.c.l.b16 %v398
          %v511 = vunpack.c.l.b16 %v399
          %v512 = vunpack.c.l.b16 %v400
          %v513 = vunpack.c.l.b16 %v401
          %v514 = vunpack.c.l.b16 %v402
          %v515 = vunpack.c.l.b16 %v403
          %v516 = vpack.c.b16 %v501, %v500
          %v517 = vpack.c.b16 %v503, %v502
          %v518 = vpack.c.b16 %v505, %v504
          %v519 = vpack.c.b16 %v507, %v506
          %v520 = vpack.c.b16 %v509, %v508
          %v521 = vpack.c.b16 %v511, %v510
          %v522 = vpack.c.b16 %v513, %v512
          %v523 = vpack.c.b16 %v515, %v514
          %532 = vmatpush.bf16.msra.mxu0 %v523
          %533 = vmatpush.bf16.msra.mxu0 %v522
          %534 = vmatpush.bf16.msra.mxu0 %v521
          %535 = vmatpush.bf16.msra.mxu0 %v520
          %536 = vmatpush.bf16.msra.mxu0 %v519
          %537 = vmatpush.bf16.msra.mxu0 %v518
          %538 = vmatpush.bf16.msra.mxu0 %v517
          %539 = vmatpush.bf16.msra.mxu0 %v516
          %540 = vmatmul.bf16.gmra.mxu0 %v468
          %v541 = vpop.f32.mrf.mxu0
          %v542 = vadd.f32 0.0, %v541
          %v543 = vpop.f32.mrf.mxu0
          %v544 = vadd.f32 0.0, %v543
          %545 = vmatmul.bf16.gmra.mxu0 %v469
          %v546 = vpop.f32.mrf.mxu0
          %v547 = vadd.f32 0.0, %v546
          %v548 = vpop.f32.mrf.mxu0
          %v549 = vadd.f32 0.0, %v548
          %550 = vmatmul.bf16.gmra.mxu0 %v470
          %v551 = vpop.f32.mrf.mxu0
          %v552 = vadd.f32 0.0, %v551
          %v553 = vpop.f32.mrf.mxu0
          %v554 = vadd.f32 0.0, %v553
          %555 = vmatmul.bf16.gmra.mxu0 %v471
          %v556 = vpop.f32.mrf.mxu0
          %v557 = vadd.f32 0.0, %v556
          %v558 = vpop.f32.mrf.mxu0
          %v559 = vadd.f32 0.0, %v558
          %560 = vmatmul.bf16.gmra.mxu0 %v472
          %v561 = vpop.f32.mrf.mxu0
          %v562 = vadd.f32 0.0, %v561
          %v563 = vpop.f32.mrf.mxu0
          %v564 = vadd.f32 0.0, %v563
          %565 = vmatmul.bf16.gmra.mxu0 %v473
          %v566 = vpop.f32.mrf.mxu0
          %v567 = vadd.f32 0.0, %v566
          %v568 = vpop.f32.mrf.mxu0
          %v569 = vadd.f32 0.0, %v568
          %570 = vmatmul.bf16.gmra.mxu0 %v474
          %v571 = vpop.f32.mrf.mxu0
          %v572 = vadd.f32 0.0, %v571
          %v573 = vpop.f32.mrf.mxu0
          %v574 = vadd.f32 0.0, %v573
          %575 = vmatmul.bf16.gmra.mxu0 %v475
          %v576 = vpop.f32.mrf.mxu0
          %v577 = vadd.f32 0.0, %v576
          %v578 = vpop.f32.mrf.mxu0
          %v579 = vadd.f32 0.0, %v578
          %580 = vdwg.mxu0
          %v581 = vadd.f32 %v404, %v542
          %v582 = vadd.f32 %v405, %v544
          %v583 = vadd.f32 %v406, %v547
          %v584 = vadd.f32 %v407, %v549
          %v585 = vadd.f32 %v408, %v552
          %v586 = vadd.f32 %v409, %v554
          %v587 = vadd.f32 %v410, %v557
          %v588 = vadd.f32 %v411, %v559
          %v589 = vadd.f32 %v412, %v562
          %v590 = vadd.f32 %v413, %v564
          %v591 = vadd.f32 %v414, %v567
          %v592 = vadd.f32 %v415, %v569
          %v593 = vadd.f32 %v416, %v572
          %v594 = vadd.f32 %v417, %v574
          %v595 = vadd.f32 %v418, %v577
          %v596 = vadd.f32 %v419, %v579
          %597 = vst [vmem:[#allocation2] sm:$0xff] %v581
          %598 = vst [vmem:[#allocation2 + $0x8] sm:$0xff] %v582
          %599 = vst [vmem:[#allocation2 + $0x10] sm:$0xff] %v583
          %600 = vst [vmem:[#allocation2 + $0x18] sm:$0xff] %v584
          %601 = vst [vmem:[#allocation2 + $0x20] sm:$0xff] %v585
          %602 = vst [vmem:[#allocation2 + $0x28] sm:$0xff] %v586
          %603 = vst [vmem:[#allocation2 + $0x30] sm:$0xff] %v587
          %604 = vst [vmem:[#allocation2 + $0x38] sm:$0xff] %v588
          %605 = vst [vmem:[#allocation2 + $0x40] sm:$0xff] %v589
          %606 = vst [vmem:[#allocation2 + $0x48] sm:$0xff] %v590
          %607 = vst [vmem:[#allocation2 + $0x50] sm:$0xff] %v591
          %608 = vst [vmem:[#allocation2 + $0x58] sm:$0xff] %v592
          %609 = vst [vmem:[#allocation2 + $0x60] sm:$0xff] %v593
          %610 = vst [vmem:[#allocation2 + $0x68] sm:$0xff] %v594
          %611 = vst [vmem:[#allocation2 + $0x70] sm:$0xff] %v595
          %612 = vst [vmem:[#allocation2 + $0x78] sm:$0xff] %v596
        $region89: #{_lambda_.6} parent=72 // pred_fallthru
          _
        %p613 = scmp.eq.s32.totalorder %s35, 2
        // Predicated region
        $region90: #{_lambda_.6} parent=72 // pred_check
          %p614 = pneg %p613
        $region91: #{_lambda_.6} parent=72 // pred_check_branch
          %616 = sbr.rel (%p614) target = $region93
        $region92: #{_lambda_.6} parent=72 // pred_region
          %v617 = vld [vmem:[%s344] sm:$0x1]
          %v618 = vperm.slane %v617, 0
          %v619 = vlaneseq
          %v620 = vshrl.u32 %v619, 7
          %vm621 = vcmp.eq.s32.totalorder %v618, %v620
          %v622 = vsel %vm621, 1, 0
          %v623 = vcvt.s32.f32 %v622
          %v624 = vld [vmem:[%s6] sm:$0xff]
          %v625 = vld [vmem:[#allocation2] sm:$0xff]
          %v626 = vld [vmem:[#allocation2 + $0x8] sm:$0xff]
          %v627 = vld [vmem:[#allocation2 + $0x10] sm:$0xff]
          %v628 = vld [vmem:[#allocation2 + $0x18] sm:$0xff]
          %v629 = vld [vmem:[#allocation2 + $0x20] sm:$0xff]
          %v630 = vld [vmem:[#allocation2 + $0x28] sm:$0xff]
          %v631 = vld [vmem:[#allocation2 + $0x30] sm:$0xff]
          %v632 = vld [vmem:[#allocation2 + $0x38] sm:$0xff]
          %v633 = vld [vmem:[#allocation2 + $0x40] sm:$0xff]
          %v634 = vld [vmem:[#allocation2 + $0x48] sm:$0xff]
          %v635 = vld [vmem:[#allocation2 + $0x50] sm:$0xff]
          %v636 = vld [vmem:[#allocation2 + $0x58] sm:$0xff]
          %v637 = vld [vmem:[#allocation2 + $0x60] sm:$0xff]
          %v638 = vld [vmem:[#allocation2 + $0x68] sm:$0xff]
          %v639 = vld [vmem:[#allocation2 + $0x70] sm:$0xff]
          %v640 = vld [vmem:[#allocation2 + $0x78] sm:$0xff]
          %641 = vmatpush.msra.mxu0 %v640
          %642 = vmatpush.msra.mxu0 %v639
          %643 = vmatpush.msra.mxu0 %v638
          %644 = vmatpush.msra.mxu0 %v637
          %645 = vmatpush.msra.mxu0 %v636
          %646 = vmatpush.msra.mxu0 %v635
          %647 = vmatpush.msra.mxu0 %v634
          %648 = vmatpush.msra.mxu0 %v633
          %649 = vmatpush.msra.mxu0 %v632
          %650 = vmatpush.msra.mxu0 %v631
          %651 = vmatpush.msra.mxu0 %v630
          %652 = vmatpush.msra.mxu0 %v629
          %653 = vmatpush.msra.mxu0 %v628
          %654 = vmatpush.msra.mxu0 %v627
          %655 = vmatpush.msra.mxu0 %v626
          %656 = vmatpush.msra.mxu0 %v625
          %657 = vmatmul.f32.gmra.mxu0 %v623
          %v658 = vpop.f32.mrf.mxu0
          %v659 = vadd.f32 0.0, %v658
          %660 = vdwg.mxu0
          %v661 = vadd.f32 %v624, %v659
          %662 = vst [vmem:[%s6] sm:$0xff] %v661
        $region93: #{_lambda_.6} parent=72 // pred_fallthru
          _
        // Predicated region
        $region94: #{_lambda_.6} parent=72 // pred_check
          %p663 = pneg %p157
        $region95: #{_lambda_.6} parent=72 // pred_check_branch
          %665 = sbr.rel (%p663) target = $region97
        $region96: #{_lambda_.6} parent=72 // pred_region
          _
        $region97: #{_lambda_.6} parent=72 // pred_fallthru
          _
        // Predicated region
        $region98: #{_lambda_.6} parent=72 // pred_check
          %p666 = pneg %p157
        $region99: #{_lambda_.6} parent=72 // pred_check_branch
          %668 = sbr.rel (%p666) target = $region101
        $region100: #{_lambda_.6} parent=72 // pred_region
          _
        $region101: #{_lambda_.6} parent=72 // pred_fallthru
          _
      $region73: #{_lambda_.6} parent=5 // pred_fallthru
        _
      %p669 = scmp.le.s32.totalorder 2, %s25
      // Predicated region
      $region102: #{_lambda_.6} parent=5 // pred_check
        %p670 = pneg %p669
      $region103: #{_lambda_.6} parent=5 // pred_check_branch
        %672 = sbr.rel (%p670) target = $region105
      $region104: #{_lambda_.6} parent=5 // pred_region
        %s673 = ssub.s32 %s25, 2
      $region105: #{_lambda_.6} parent=5 // pred_fallthru
        _
    $region6: #{_lambda_.6} parent=1 // loop_footer
      %s29 = sadd.s32 1, %s25
    $region7: #{_lambda_.6} parent=1 // loop_footer_branch
      %24 = sbr.rel target = $region3
    $region8: #{_lambda_.6} parent=1 // loop_exit
      _

</llo_original>
